<compile_context>
chip_gen: v6e
topology: v6e:2x2x1
jax: 0.10.0
libtpu: 0.0.40
codegen_flags: <defaults>
</compile_context>

<pallas_src>
import functools

import jax
import jax.numpy as jnp
from jax import lax
from jax.experimental import pallas as pl
from jax.experimental.pallas import tpu as pltpu

_LANE = 128
_MIB = 1024 * 1024


def mhsa_kernel(x_ref, wkqv_ref, bkqv_ref, pos_ref, o_ref, slab_ref, lhs_ref,
                *, mxu_dtype, approx_recip):
    B, S, Cp = x_ref.shape

    # Fused K/Q/V projection over the whole batch block: one wide MXU matmul.
    # Weights were pre-transposed + concatenated as [Wk^T|Wq^T|Wv^T] in the
    # wrapper, so the slab is [k | q | v].  Bias is added in f32, then the
    # slab is cast ONCE to mxu_dtype (no f32 slab survives the projection).
    xf = x_ref[...].reshape(B * S, Cp).astype(mxu_dtype)
    proj = jnp.dot(xf, wkqv_ref[...], preferred_element_type=jnp.float32)
    slab_ref[...] = (proj + bkqv_ref[...]).astype(mxu_dtype)     # (B*S, 3Cp)

    # Loop-invariant half of the energy LHS: lhs = [ q | pos ].  pos is
    # written once per grid step (NOT gated on program_id==0, so it stays
    # correct under megacore grid sharding; NOT per batch element either).
    lhs_ref[:, Cp:] = pos_ref[...]

    def body(b, carry):
        start = b * S
        if S % 8 == 0:
            start = pl.multiple_of(start, 8)
        sb = slab_ref[pl.ds(start, S), :]                        # (S, 3Cp)
        kq = sb[:, : 2 * Cp]                                     # [k | q]
        q = sb[:, Cp: 2 * Cp]
        v = sb[:, 2 * Cp:]

        lhs_ref[:, :Cp] = q                                      # lhs = [q | pos]
        # energy = q @ k^T + pos @ q^T fused into ONE matmul, contracting the
        # last dims of both operands (no transposes materialized).
        energy = lax.dot_general(
            lhs_ref[...], kq,
            dimension_numbers=(((1,), (1,)), ((), ())),
            preferred_element_type=jnp.float32)                  # (S, S) f32

        # Numerically stable softmax with DEFERRED normalization: scale the
        # (S, Cp) output by 1/sum instead of the (S, S) matrix.
        m = jnp.max(energy, axis=-1, keepdims=True)
        e = jnp.exp(energy - m)
        inv = pl.reciprocal(jnp.sum(e, axis=-1, keepdims=True), approx=approx_recip)
        out = jnp.dot(e.astype(mxu_dtype), v,
                      preferred_element_type=jnp.float32)        # (S, Cp) f32
        o_ref[b] = (out * inv).astype(o_ref.dtype)
        return carry

    # fori_loop (not a Python unroll) bounds the live range of the (S, S)
    # temporaries to a single batch element.
    lax.fori_loop(0, B, body, None)


def _vmem_estimate(bt, S, Cp, io_isz, mxu_isz, const_bufs):
    est = 2 * 2 * bt * S * Cp * io_isz                              # x / out blocks (double-buffered)
    est += bt * S * 3 * Cp * mxu_isz                                # [k|q|v] slab scratch
    est += bt * S * 3 * Cp * 4                                      # transient f32 projection result
    est += S * 2 * Cp * mxu_isz                                     # [q | pos] scratch
    est += const_bufs * (3 * Cp * Cp + 3 * Cp + S * Cp) * mxu_isz   # wkqv / bias / pos
    est += 2 * S * S * 4 + S * S * mxu_isz + S * Cp * 4             # energy / exp / attn / out temps
    return est


def mhsa_pallas(x_nchw, wq, bq, wk, bk, wv, bv, rel_h, rel_w,
                *, use_bf16_mxu=True, batch_tile=None):
    """x_nchw: (N, C, W, H). wq/wk/wv: (C, C). b*: (C,).
    rel_h: (1, C, 1, H), rel_w: (1, C, W, 1). Returns (N, C, W, H)."""
    N, C, W, H = x_nchw.shape
    S = W * H
    mxu_dtype = jnp.bfloat16 if use_bf16_mxu else jnp.float32
    io_isz = jnp.dtype(x_nchw.dtype).itemsize
    mxu_isz = jnp.dtype(mxu_dtype).itemsize

    # Pad channels to a lane-width multiple (zero pad -> energies/outputs are
    # unchanged; padded output channels are zero and sliced off below).
    Cp = max(_LANE, ((C + _LANE - 1) // _LANE) * _LANE)
    pad = Cp - C

    # ---- pure-JAX glue: layout conversion & loop-invariant precompute ----
    x_nsc = jnp.transpose(x_nchw.reshape(N, C, S), (0, 2, 1))             # (N, S, C)
    pos = jnp.transpose((rel_h + rel_w).reshape(C, S), (1, 0))            # (S, C)
    if pad:
        x_nsc = jnp.pad(x_nsc, ((0, 0), (0, 0), (0, pad)))
        pos = jnp.pad(pos, ((0, 0), (0, pad)))
        wq_, wk_, wv_ = (jnp.pad(w, ((0, pad), (0, pad))) for w in (wq, wk, wv))
        bq_, bk_, bv_ = (jnp.pad(b, (0, pad)) for b in (bq, bk, bv))
    else:
        wq_, wk_, wv_, bq_, bk_, bv_ = wq, wk, wv, bq, bk, bv

    # Fused, pre-transposed projection weights: y = x @ W^T for each of k,q,v.
    wkqv = jnp.concatenate([wk_.T, wq_.T, wv_.T], axis=1).astype(mxu_dtype)  # (Cp, 3Cp)
    bkqv = jnp.concatenate([bk_, bq_, bv_]).reshape(1, 3 * Cp).astype(jnp.float32)
    pos = pos.astype(mxu_dtype)

    # ---- generation-aware VMEM budget ----
    try:
        vmem_cap = int(pltpu.get_tpu_info().vmem_capacity_bytes)
    except Exception:
        vmem_cap = 64 * _MIB                      # conservative (v7x-sized) fallback
    vmem_budget = (3 * vmem_cap) // 4             # leave headroom for compiler scratch

    # ---- batch tile: fill the MXU M dim (256-wide on v6e/v7x), keep >= 2
    # grid steps for megacore / dual-TC, and stay inside the VMEM budget. ----
    if batch_tile is None:
        target_m = max(1, -(-256 // S))
        batch_tile = 1
        for d in range(1, N + 1):
            if N % d or d > target_m:
                continue
            if N >= 2 and N // d < 2:             # keep both TensorCores busy
                continue
            batch_tile = d
    while batch_tile > 1 and _vmem_estimate(batch_tile, S, Cp, io_isz, mxu_isz, 1) > vmem_budget:
        batch_tile = max(d for d in range(1, batch_tile) if N % d == 0)
    assert N % batch_tile == 0, (N, batch_tile)
    grid = (N // batch_tile,)

    est = _vmem_estimate(batch_tile, S, Cp, io_isz, mxu_isz, 2)
    vmem_limit = int(min(max(2 * est, 32 * _MIB), vmem_budget))

    cost = pl.CostEstimate(
        flops=int(N * (6 * S * Cp * Cp + 6 * S * S * Cp)),
        transcendentals=int(N * S * S),
        bytes_accessed=int((2 * N * S * Cp + 3 * Cp * Cp + S * Cp + 3 * Cp) * io_isz))

    kernel = functools.partial(mhsa_kernel, mxu_dtype=mxu_dtype,
                               approx_recip=use_bf16_mxu)

    def run(single_buffer_consts):
        # Grid-invariant operands never re-DMA; single-buffer them to reclaim VMEM.
        const_kw = {"pipeline_mode": pl.Buffered(1)} if single_buffer_consts else {}
        return pl.pallas_call(
            kernel,
            out_shape=jax.ShapeDtypeStruct((N, S, Cp), x_nchw.dtype),
            grid_spec=pltpu.PrefetchScalarGridSpec(
                num_scalar_prefetch=0,
                grid=grid,
                in_specs=[
                    pl.BlockSpec((batch_tile, S, Cp), lambda n: (n, 0, 0)),     # x
                    pl.BlockSpec((Cp, 3 * Cp), lambda n: (0, 0), **const_kw),   # [Wk|Wq|Wv]^T
                    pl.BlockSpec((1, 3 * Cp), lambda n: (0, 0), **const_kw),    # bias
                    pl.BlockSpec((S, Cp), lambda n: (0, 0), **const_kw),        # pos
                ],
                out_specs=pl.BlockSpec((batch_tile, S, Cp), lambda n: (n, 0, 0)),
                scratch_shapes=[
                    pltpu.VMEM((batch_tile * S, 3 * Cp), mxu_dtype),   # [k|q|v] slab
                    pltpu.VMEM((S, 2 * Cp), mxu_dtype),                # [q | pos] lhs
                ],
            ),
            compiler_params=pltpu.CompilerParams(
                dimension_semantics=("parallel",),
                vmem_limit_bytes=vmem_limit),
            cost_estimate=cost,
        )(x_nsc, wkqv, bkqv, pos)

    try:
        out_nsc = run(True)
    except Exception:
        out_nsc = run(False)      # fall back to default double-buffering of constants

    # glue: drop channel pad, (N, S, C) -> (N, C, S) -> (N, C, W, H)
    out_nsc = out_nsc[:, :, :C]
    return jnp.transpose(out_nsc, (0, 2, 1)).reshape(N, C, W, H)


def mhsa_reference(x, wq, bq, wk, bk, wv, bv, rel_h, rel_w):
    """Pure-JAX reference mirroring the PyTorch forward exactly."""
    N, C, W, H = x.shape
    S = W * H

    def conv1x1(x, w, b):
        xf = x.reshape(N, C, S)
        return jnp.einsum('oc,ncs->nos', w, xf) + b.reshape(1, C, 1)

    q = conv1x1(x, wq, bq)
    k = conv1x1(x, wk, bk)
    v = conv1x1(x, wv, bv)
    content_content = jnp.einsum('ncs,nct->nst', q, k)
    pos = jnp.transpose((rel_h + rel_w).reshape(1, C, S), (0, 2, 1))  # (1, S, C)
    content_position = jnp.einsum('zsc,nct->nst', pos, q)
    energy = content_content + content_position
    attn = jax.nn.softmax(energy, axis=-1)
    out = jnp.einsum('ncs,nts->nct', v, attn)
    return out.reshape(N, C, W, H)


if __name__ == "__main__":
    # Small, module-consistent shapes: batch=2, channels=8, spatial=8x8.
    N, C, W, H = 2, 8, 8, 8

    key = jax.random.PRNGKey(0)
    keys = jax.random.split(key, 10)
    x = jax.random.normal(keys[0], (N, C, W, H), dtype=jnp.float32)
    wq = jax.random.normal(keys[1], (C, C), dtype=jnp.float32) * 0.1
    bq = jax.random.normal(keys[2], (C,), dtype=jnp.float32) * 0.1
    wk = jax.random.normal(keys[3], (C, C), dtype=jnp.float32) * 0.1
    bk = jax.random.normal(keys[4], (C,), dtype=jnp.float32) * 0.1
    wv = jax.random.normal(keys[5], (C, C), dtype=jnp.float32) * 0.1
    bv = jax.random.normal(keys[6], (C,), dtype=jnp.float32) * 0.1
    rel_h = jax.random.normal(keys[7], (1, C, 1, H), dtype=jnp.float32)
    rel_w = jax.random.normal(keys[8], (1, C, W, 1), dtype=jnp.float32)

    ref = mhsa_reference(x, wq, bq, wk, bk, wv, bv, rel_h, rel_w)

    # Default (fast) path: bf16 MXU operands, f32 accumulation + softmax,
    # batch_tile chosen automatically (grid of 2 -> both TCs on v7x).
    out = mhsa_pallas(x, wq, bq, wk, bk, wv, bv, rel_h, rel_w)
    out = jax.block_until_ready(out)
    assert out.shape == (N, C, W, H)
    assert jnp.allclose(out, ref, rtol=2e-2, atol=2e-2), "bf16 path mismatch vs reference"

    # Exercise the multi-batch-per-step (fori_loop) path explicitly.
    out_bt2 = mhsa_pallas(x, wq, bq, wk, bk, wv, bv, rel_h, rel_w, batch_tile=2)
    out_bt2 = jax.block_until_ready(out_bt2)
    assert jnp.allclose(out_bt2, ref, rtol=2e-2, atol=2e-2), "batch_tile=2 mismatch vs reference"

    # Full-precision path sanity check (f32 MXU operands, exact reciprocal).
    out_f32 = mhsa_pallas(x, wq, bq, wk, bk, wv, bv, rel_h, rel_w,
                          use_bf16_mxu=False)
    out_f32 = jax.block_until_ready(out_f32)
    assert jnp.allclose(out_f32, ref, rtol=5e-3, atol=5e-3), "f32 path mismatch vs reference"

    print("KERNEL_OK")
</pallas_src>

<mosaic_0001>
module attributes {stable_mosaic.version = 11 : i64} {
  func.func @mhsa_kernel(%arg0: i32, %arg1: memref<1x64x128xf32, #tpu.memory_space<vmem>>, %arg2: memref<128x384xbf16, #tpu.memory_space<vmem>>, %arg3: memref<1x384xf32, #tpu.memory_space<vmem>>, %arg4: memref<64x128xbf16, #tpu.memory_space<vmem>>, %arg5: memref<1x64x128xf32, #tpu.memory_space<vmem>>, %arg6: memref<64x384xbf16, #tpu.memory_space<vmem>>, %arg7: memref<64x256xbf16, #tpu.memory_space<vmem>>) attributes {dimension_semantics = [#tpu.dimension_semantics<parallel>], iteration_bounds = array<i64: 2>, scalar_prefetch = 0 : i64, scratch_operands = 2 : i64, tpu.core_type = #tpu.core_type<tc>, window_params = [{transform_indices = @transform_0, window_bounds = array<i64: 1, 64, 128>}, {pipeline_mode = #tpu.pipeline_mode<synchronous>, transform_indices = @transform_1, window_bounds = array<i64: 128, 384>}, {pipeline_mode = #tpu.pipeline_mode<synchronous>, transform_indices = @transform_2, window_bounds = array<i64: 1, 384>}, {pipeline_mode = #tpu.pipeline_mode<synchronous>, transform_indices = @transform_3, window_bounds = array<i64: 64, 128>}, {transform_indices = @transform_4, window_bounds = array<i64: 1, 64, 128>}]} {
    %c0 = arith.constant 0 : index
    %c0_0 = arith.constant 0 : index
    %c0_1 = arith.constant 0 : index
    %0 = vector.load %arg1[%c0, %c0_0, %c0_1] : memref<1x64x128xf32, #tpu.memory_space<vmem>>, vector<1x64x128xf32>
    %1 = vector.shape_cast %0 : vector<1x64x128xf32> to vector<64x128xf32>
    %2 = arith.truncf %1 : vector<64x128xf32> to vector<64x128xbf16>
    %c0_2 = arith.constant 0 : index
    %c0_3 = arith.constant 0 : index
    %3 = vector.load %arg2[%c0_2, %c0_3] : memref<128x384xbf16, #tpu.memory_space<vmem>>, vector<128x384xbf16>
    %cst = arith.constant dense<0.000000e+00> : vector<64x384xf32>
    %4 = tpu.matmul %2, %3, %cst {dimension_numbers = #tpu.dot_dimension_numbers<[1], [0], [0], [1], [0, 0, 1, 1], [], []>} : vector<64x128xbf16>, vector<128x384xbf16>, vector<64x384xf32> -> vector<64x384xf32>
    %c0_4 = arith.constant 0 : index
    %c0_5 = arith.constant 0 : index
    %5 = vector.load %arg3[%c0_4, %c0_5] : memref<1x384xf32, #tpu.memory_space<vmem>>, vector<1x384xf32>
    %6 = vector.broadcast %5 : vector<1x384xf32> to vector<64x384xf32>
    %7 = arith.addf %4, %6 : vector<64x384xf32>
    %8 = arith.truncf %7 : vector<64x384xf32> to vector<64x384xbf16>
    %c0_6 = arith.constant 0 : index
    %c0_7 = arith.constant 0 : index
    %9 = vector.load %arg6[%c0_6, %c0_7] : memref<64x384xbf16, #tpu.memory_space<vmem>>, vector<64x384xbf16>
    tpu.vector_store %arg6[%c0_6, %c0_7], %8 {strides = array<i32>} : memref<64x384xbf16, #tpu.memory_space<vmem>>, vector<64x384xbf16>,
    %c0_8 = arith.constant 0 : index
    %c0_9 = arith.constant 0 : index
    %10 = vector.load %arg4[%c0_8, %c0_9] : memref<64x128xbf16, #tpu.memory_space<vmem>>, vector<64x128xbf16>
    %c0_10 = arith.constant 0 : index
    %c128 = arith.constant 128 : index
    %11 = vector.load %arg7[%c0_10, %c128] : memref<64x256xbf16, #tpu.memory_space<vmem>>, vector<64x128xbf16>
    tpu.vector_store %arg7[%c0_10, %c128], %10 {strides = array<i32>} : memref<64x256xbf16, #tpu.memory_space<vmem>>, vector<64x128xbf16>,
    %c0_i32 = arith.constant 0 : i32
    %c64_i32 = arith.constant 64 : i32
    %12 = arith.muli %c0_i32, %c64_i32 : i32
    %13 = tpu.assume_multiple %12, 8 : i32
    %14 = arith.index_cast %13 : i32 to index
    %c0_11 = arith.constant 0 : index
    %15 = vector.load %arg6[%14, %c0_11] : memref<64x384xbf16, #tpu.memory_space<vmem>>, vector<64x384xbf16>
    %16 = vector.extract_strided_slice %15 {offsets = [0, 0], sizes = [64, 256], strides = [1, 1]} : vector<64x384xbf16> to vector<64x256xbf16>
    %17 = vector.extract_strided_slice %15 {offsets = [0, 128], sizes = [64, 128], strides = [1, 1]} : vector<64x384xbf16> to vector<64x128xbf16>
    %18 = vector.extract_strided_slice %15 {offsets = [0, 256], sizes = [64, 128], strides = [1, 1]} : vector<64x384xbf16> to vector<64x128xbf16>
    %c0_12 = arith.constant 0 : index
    %c0_13 = arith.constant 0 : index
    %19 = vector.load %arg7[%c0_12, %c0_13] : memref<64x256xbf16, #tpu.memory_space<vmem>>, vector<64x128xbf16>
    tpu.vector_store %arg7[%c0_12, %c0_13], %17 {strides = array<i32>} : memref<64x256xbf16, #tpu.memory_space<vmem>>, vector<64x128xbf16>,
    %c0_14 = arith.constant 0 : index
    %c0_15 = arith.constant 0 : index
    %20 = vector.load %arg7[%c0_14, %c0_15] : memref<64x256xbf16, #tpu.memory_space<vmem>>, vector<64x256xbf16>
    %cst_16 = arith.constant dense<0.000000e+00> : vector<64x64xf32>
    %21 = tpu.matmul %20, %16, %cst_16 {dimension_numbers = #tpu.dot_dimension_numbers<[1], [1], [0], [0], [0, 0, 1, 0], [], []>} : vector<64x256xbf16>, vector<64x256xbf16>, vector<64x64xf32> -> vector<64x64xf32>
    %cst_17 = arith.constant dense<0xFF800000> : vector<64xf32>
    %22 = vector.multi_reduction <maximumf>, %21, %cst_17 [1] : vector<64x64xf32> to vector<64xf32>
    %23 = vector.shape_cast %22 : vector<64xf32> to vector<64x1xf32>
    %24 = vector.broadcast %23 : vector<64x1xf32> to vector<64x64xf32>
    %25 = arith.subf %21, %24 : vector<64x64xf32>
    %26 = math.exp %25 : vector<64x64xf32>
    %cst_18 = arith.constant dense<0.000000e+00> : vector<64xf32>
    %27 = vector.multi_reduction <add>, %26, %cst_18 [1] : vector<64x64xf32> to vector<64xf32>
    %28 = vector.shape_cast %27 : vector<64xf32> to vector<64x1xf32>
    %29 = tpu.reciprocal %28 {approx = true} : vector<64x1xf32> -> vector<64x1xf32>
    %30 = arith.truncf %26 : vector<64x64xf32> to vector<64x64xbf16>
    %cst_19 = arith.constant dense<0.000000e+00> : vector<64x128xf32>
    %31 = tpu.matmul %30, %18, %cst_19 {dimension_numbers = #tpu.dot_dimension_numbers<[1], [0], [0], [1], [0, 0, 1, 1], [], []>} : vector<64x64xbf16>, vector<64x128xbf16>, vector<64x128xf32> -> vector<64x128xf32>
    %32 = vector.broadcast %29 : vector<64x1xf32> to vector<64x128xf32>
    %33 = arith.mulf %31, %32 : vector<64x128xf32>
    %34 = arith.index_cast %c0_i32 : i32 to index
    %c0_20 = arith.constant 0 : index
    %c0_21 = arith.constant 0 : index
    %35 = vector.load %arg5[%34, %c0_20, %c0_21] : memref<1x64x128xf32, #tpu.memory_space<vmem>>, vector<1x64x128xf32>
    %36 = vector.shape_cast %35 : vector<1x64x128xf32> to vector<64x128xf32>
    %37 = vector.shape_cast %33 : vector<64x128xf32> to vector<1x64x128xf32>
    tpu.vector_store %arg5[%34, %c0_20, %c0_21], %37 {strides = array<i32>} : memref<1x64x128xf32, #tpu.memory_space<vmem>>, vector<1x64x128xf32>,
    %c1_i32 = arith.constant 1 : i32
    return
  }
  func.func @transform_0(%arg0: i32) -> (i32, i32, i32) {
    %c0_i32 = arith.constant 0 : i32
    %c0_i32_0 = arith.constant 0 : i32
    %c0_i32_1 = arith.constant 0 : i32
    return %arg0, %c0_i32, %c0_i32_0 : i32, i32, i32
  }
  func.func @transform_1(%arg0: i32) -> (i32, i32) {
    %c0_i32 = arith.constant 0 : i32
    %c0_i32_0 = arith.constant 0 : i32
    %c0_i32_1 = arith.constant 0 : i32
    return %c0_i32, %c0_i32_0 : i32, i32
  }
  func.func @transform_2(%arg0: i32) -> (i32, i32) {
    %c0_i32 = arith.constant 0 : i32
    %c0_i32_0 = arith.constant 0 : i32
    %c0_i32_1 = arith.constant 0 : i32
    return %c0_i32, %c0_i32_0 : i32, i32
  }
  func.func @transform_3(%arg0: i32) -> (i32, i32) {
    %c0_i32 = arith.constant 0 : i32
    %c0_i32_0 = arith.constant 0 : i32
    %c0_i32_1 = arith.constant 0 : i32
    return %c0_i32, %c0_i32_0 : i32, i32
  }
  func.func @transform_4(%arg0: i32) -> (i32, i32, i32) {
    %c0_i32 = arith.constant 0 : i32
    %c0_i32_0 = arith.constant 0 : i32
    %c0_i32_1 = arith.constant 0 : i32
    return %arg0, %c0_i32, %c0_i32_0 : i32, i32, i32
  }
}

module attributes {stable_mosaic.version = 11 : i64} {
  func.func @mhsa_kernel(%arg0: i32, %arg1: memref<1x64x128xf32, #tpu.memory_space<vmem>>, %arg2: memref<128x384xbf16, #tpu.memory_space<vmem>>, %arg3: memref<1x384xf32, #tpu.memory_space<vmem>>, %arg4: memref<64x128xbf16, #tpu.memory_space<vmem>>, %arg5: memref<1x64x128xf32, #tpu.memory_space<vmem>>, %arg6: memref<64x384xbf16, #tpu.memory_space<vmem>>, %arg7: memref<64x256xbf16, #tpu.memory_space<vmem>>) attributes {dimension_semantics = [#tpu.dimension_semantics<parallel>], iteration_bounds = array<i64: 2>, scalar_prefetch = 0 : i64, scratch_operands = 2 : i64, tpu.core_type = #tpu.core_type<tc>, window_params = [{transform_indices = @transform_0, window_bounds = array<i64: 1, 64, 128>}, {pipeline_mode = #tpu.pipeline_mode<synchronous>, transform_indices = @transform_1, window_bounds = array<i64: 128, 384>}, {pipeline_mode = #tpu.pipeline_mode<synchronous>, transform_indices = @transform_2, window_bounds = array<i64: 1, 384>}, {pipeline_mode = #tpu.pipeline_mode<synchronous>, transform_indices = @transform_3, window_bounds = array<i64: 64, 128>}, {transform_indices = @transform_4, window_bounds = array<i64: 1, 64, 128>}]} {
    %c0 = arith.constant 0 : index
    %c0_0 = arith.constant 0 : index
    %c0_1 = arith.constant 0 : index
    %0 = vector.load %arg1[%c0, %c0_0, %c0_1] : memref<1x64x128xf32, #tpu.memory_space<vmem>>, vector<1x64x128xf32>
    %1 = vector.shape_cast %0 : vector<1x64x128xf32> to vector<64x128xf32>
    %2 = arith.truncf %1 : vector<64x128xf32> to vector<64x128xbf16>
    %c0_2 = arith.constant 0 : index
    %c0_3 = arith.constant 0 : index
    %3 = vector.load %arg2[%c0_2, %c0_3] : memref<128x384xbf16, #tpu.memory_space<vmem>>, vector<128x384xbf16>
    %cst = arith.constant dense<0.000000e+00> : vector<64x384xf32>
    %4 = tpu.matmul %2, %3, %cst {dimension_numbers = #tpu.dot_dimension_numbers<[1], [0], [0], [1], [0, 0, 1, 1], [], []>} : vector<64x128xbf16>, vector<128x384xbf16>, vector<64x384xf32> -> vector<64x384xf32>
    %c0_4 = arith.constant 0 : index
    %c0_5 = arith.constant 0 : index
    %5 = vector.load %arg3[%c0_4, %c0_5] : memref<1x384xf32, #tpu.memory_space<vmem>>, vector<1x384xf32>
    %6 = vector.broadcast %5 : vector<1x384xf32> to vector<64x384xf32>
    %7 = arith.addf %4, %6 : vector<64x384xf32>
    %8 = arith.truncf %7 : vector<64x384xf32> to vector<64x384xbf16>
    %c0_6 = arith.constant 0 : index
    %c0_7 = arith.constant 0 : index
    %9 = vector.load %arg6[%c0_6, %c0_7] : memref<64x384xbf16, #tpu.memory_space<vmem>>, vector<64x384xbf16>
    tpu.vector_store %arg6[%c0_6, %c0_7], %8 {strides = array<i32>} : memref<64x384xbf16, #tpu.memory_space<vmem>>, vector<64x384xbf16>,
    %c0_8 = arith.constant 0 : index
    %c0_9 = arith.constant 0 : index
    %10 = vector.load %arg4[%c0_8, %c0_9] : memref<64x128xbf16, #tpu.memory_space<vmem>>, vector<64x128xbf16>
    %c0_10 = arith.constant 0 : index
    %c128 = arith.constant 128 : index
    %11 = vector.load %arg7[%c0_10, %c128] : memref<64x256xbf16, #tpu.memory_space<vmem>>, vector<64x128xbf16>
    tpu.vector_store %arg7[%c0_10, %c128], %10 {strides = array<i32>} : memref<64x256xbf16, #tpu.memory_space<vmem>>, vector<64x128xbf16>,
    %c0_i32 = arith.constant 0 : i32
    %c64_i32 = arith.constant 64 : i32
    %12 = arith.muli %c0_i32, %c64_i32 : i32
    %13 = tpu.assume_multiple %12, 8 : i32
    %14 = arith.index_cast %13 : i32 to index
    %c0_11 = arith.constant 0 : index
    %15 = vector.load %arg6[%14, %c0_11] : memref<64x384xbf16, #tpu.memory_space<vmem>>, vector<64x384xbf16>
    %16 = vector.extract_strided_slice %15 {offsets = [0, 0], sizes = [64, 256], strides = [1, 1]} : vector<64x384xbf16> to vector<64x256xbf16>
    %17 = vector.extract_strided_slice %15 {offsets = [0, 128], sizes = [64, 128], strides = [1, 1]} : vector<64x384xbf16> to vector<64x128xbf16>
    %18 = vector.extract_strided_slice %15 {offsets = [0, 256], sizes = [64, 128], strides = [1, 1]} : vector<64x384xbf16> to vector<64x128xbf16>
    %c0_12 = arith.constant 0 : index
    %c0_13 = arith.constant 0 : index
    %19 = vector.load %arg7[%c0_12, %c0_13] : memref<64x256xbf16, #tpu.memory_space<vmem>>, vector<64x128xbf16>
    tpu.vector_store %arg7[%c0_12, %c0_13], %17 {strides = array<i32>} : memref<64x256xbf16, #tpu.memory_space<vmem>>, vector<64x128xbf16>,
    %c0_14 = arith.constant 0 : index
    %c0_15 = arith.constant 0 : index
    %20 = vector.load %arg7[%c0_14, %c0_15] : memref<64x256xbf16, #tpu.memory_space<vmem>>, vector<64x256xbf16>
    %cst_16 = arith.constant dense<0.000000e+00> : vector<64x64xf32>
    %21 = tpu.matmul %20, %16, %cst_16 {dimension_numbers = #tpu.dot_dimension_numbers<[1], [1], [0], [0], [0, 0, 1, 0], [], []>} : vector<64x256xbf16>, vector<64x256xbf16>, vector<64x64xf32> -> vector<64x64xf32>
    %cst_17 = arith.constant dense<0xFF800000> : vector<64xf32>
    %22 = vector.multi_reduction <maximumf>, %21, %cst_17 [1] : vector<64x64xf32> to vector<64xf32>
    %23 = vector.shape_cast %22 : vector<64xf32> to vector<64x1xf32>
    %24 = vector.broadcast %23 : vector<64x1xf32> to vector<64x64xf32>
    %25 = arith.subf %21, %24 : vector<64x64xf32>
    %26 = math.exp %25 : vector<64x64xf32>
    %cst_18 = arith.constant dense<0.000000e+00> : vector<64xf32>
    %27 = vector.multi_reduction <add>, %26, %cst_18 [1] : vector<64x64xf32> to vector<64xf32>
    %28 = vector.shape_cast %27 : vector<64xf32> to vector<64x1xf32>
    %29 = tpu.reciprocal %28 {approx = true} : vector<64x1xf32> -> vector<64x1xf32>
    %30 = arith.truncf %26 : vector<64x64xf32> to vector<64x64xbf16>
    %cst_19 = arith.constant dense<0.000000e+00> : vector<64x128xf32>
    %31 = tpu.matmul %30, %18, %cst_19 {dimension_numbers = #tpu.dot_dimension_numbers<[1], [0], [0], [1], [0, 0, 1, 1], [], []>} : vector<64x64xbf16>, vector<64x128xbf16>, vector<64x128xf32> -> vector<64x128xf32>
    %32 = vector.broadcast %29 : vector<64x1xf32> to vector<64x128xf32>
    %33 = arith.mulf %31, %32 : vector<64x128xf32>
    %34 = arith.index_cast %c0_i32 : i32 to index
    %c0_20 = arith.constant 0 : index
    %c0_21 = arith.constant 0 : index
    %35 = vector.load %arg5[%34, %c0_20, %c0_21] : memref<1x64x128xf32, #tpu.memory_space<vmem>>, vector<1x64x128xf32>
    %36 = vector.shape_cast %35 : vector<1x64x128xf32> to vector<64x128xf32>
    %37 = vector.shape_cast %33 : vector<64x128xf32> to vector<1x64x128xf32>
    tpu.vector_store %arg5[%34, %c0_20, %c0_21], %37 {strides = array<i32>} : memref<1x64x128xf32, #tpu.memory_space<vmem>>, vector<1x64x128xf32>,
    %c1_i32 = arith.constant 1 : i32
    return
  }
  func.func @transform_0(%arg0: i32) -> (i32, i32, i32) {
    %c0_i32 = arith.constant 0 : i32
    %c0_i32_0 = arith.constant 0 : i32
    %c0_i32_1 = arith.constant 0 : i32
    return %arg0, %c0_i32, %c0_i32_0 : i32, i32, i32
  }
  func.func @transform_1(%arg0: i32) -> (i32, i32) {
    %c0_i32 = arith.constant 0 : i32
    %c0_i32_0 = arith.constant 0 : i32
    %c0_i32_1 = arith.constant 0 : i32
    return %c0_i32, %c0_i32_0 : i32, i32
  }
  func.func @transform_2(%arg0: i32) -> (i32, i32) {
    %c0_i32 = arith.constant 0 : i32
    %c0_i32_0 = arith.constant 0 : i32
    %c0_i32_1 = arith.constant 0 : i32
    return %c0_i32, %c0_i32_0 : i32, i32
  }
  func.func @transform_3(%arg0: i32) -> (i32, i32) {
    %c0_i32 = arith.constant 0 : i32
    %c0_i32_0 = arith.constant 0 : i32
    %c0_i32_1 = arith.constant 0 : i32
    return %c0_i32, %c0_i32_0 : i32, i32
  }
  func.func @transform_4(%arg0: i32) -> (i32, i32, i32) {
    %c0_i32 = arith.constant 0 : i32
    %c0_i32_0 = arith.constant 0 : i32
    %c0_i32_1 = arith.constant 0 : i32
    return %arg0, %c0_i32, %c0_i32_0 : i32, i32, i32
  }
}

</mosaic_0001>

<llo_original>
// kernel: tpu_custom_call.1
$region0: #{tpu_custom_call.1}
  #allocation0 [shape = 'u32[]', space=smem, size = 0x4, offset = 0x4, fixed_abs, tag = 'smem constant byte address 0x4 - core index']
  #allocation1 [shape = 'u32[144,128]{1,0:T(1,128)}', space=vmem, size = 0x12000, scoped, tag = 'internal scratch']
  #allocation2 [shape = 'bf16[64,384]{1,0:T(8,128)(2,1)}', space=vmem, size = 0xc000, scoped, tag = 'scratch operand']
  #allocation3 [shape = 'bf16[64,256]{1,0:T(8,128)(2,1)}', space=vmem, size = 0x8000, scoped, tag = 'scratch operand']
  %s0 = inlined_call_operand.hbm [shape: f32[2,64,128], index: 0, kind: input, shape index: {}]
  %s1 = inlined_call_operand.hbm [shape: bf16[128,384], index: 1, kind: input, shape index: {}]
  %s2 = inlined_call_operand.vmem [shape: f32[1,384], index: 2, kind: input, shape index: {}]
  %s3 = inlined_call_operand.hbm [shape: bf16[64,128], index: 3, kind: input, shape index: {}]
  %s4 = inlined_call_operand.hbm [shape: f32[2,64,128], index: 4, kind: output, shape index: {}]
  %s5 = sld [smem:[#allocation0]]
  $region61: #{tpu_custom_call.1} parent=0
    _
  %s7 = ssub.s32 1, %s5
  %s8 = scalar_select 0, %s7, %s5
  $region1: #{tpu_custom_call.1} parent=0
    #allocation4 [shape = 'u8[65536]{0}', space=vmem, size = 0x10000, scoped, tag = 'input window, operand 0']
    #allocation5 [shape = 's32[2]{0}', space=sflag, size = 0x8, scoped, tag = 'scoped memory for tpu_custom_call.1']
    #allocation6 [shape = 's32[2]{0}', space=sflag, size = 0x8, scoped, tag = 'scoped memory for tpu_custom_call.1']
    #allocation7 [shape = 'u8[98304]{0}', space=vmem, size = 0x18000, scoped, tag = 'input window, operand 1, single buffered']
    #allocation8 [shape = 's32[1]{0}', space=sflag, size = 0x4, scoped, tag = 'scoped memory for tpu_custom_call.1']
    #allocation9 [shape = 'u8[16384]{0}', space=vmem, size = 0x4000, scoped, tag = 'input window, operand 3, single buffered']
    #allocation10 [shape = 'u8[65536]{0}', space=vmem, size = 0x10000, scoped, tag = 'output window, operand 0']
    %9 = vsyncpa [#allocation5], 0
    %s10 = scalar_lea.sflag [#allocation5], 1
    %11 = vsyncpa %s10, 0
    %12 = vsyncpa [#allocation8], 0
    %13 = vsyncpa [#allocation6], 0
    %s14 = scalar_lea.sflag [#allocation6], 1
    %15 = vsyncpa %s14, 0
    loop: start=0, step=1, limit=4
    $region2: #{tpu_custom_call.1} parent=1 // loop_pre_header
      _
    $region3: #{tpu_custom_call.1} parent=1 // loop_header
      %s17 = sphi 0, %s21
      %p18 = scmp.ge.s32.totalorder %s17, 4
      %s27 = sphi 0, %s29
      %s30 = sphi 0, %s27
      %s31 = sphi 0, %s30
      %s47 = sphi 0, %s31
      %s51 = sphi 0, %s51
      %s53 = sphi 0, %s51
      %s54 = sphi 0, %s53
      %s68 = sphi 0, %s54
      %s72 = sphi 0, %s72
      %s74 = sphi 0, %s72
      %s75 = sphi 0, %s74
      %s89 = sphi 0, %s75
      %s93 = sphi 0, %s93
      %s95 = sphi 0, %s93
      %s96 = sphi 0, %s95
      %s110 = sphi 0, %s96
      %s116 = sphi 0, %s118
      %s119 = sphi 0, %s116
      %s120 = sphi 0, %s119
      %s136 = sphi 0, %s120
    $region4: #{tpu_custom_call.1} parent=1 // loop_header_branch
      %20 = sbr.rel (%p18) target = $region8
    $region5: #{tpu_custom_call.1} parent=1 // loop_body
      %s22 = ssub.s32 %s17, 1
      %s23 = ssub.s32 %s17, 2
      %s24 = sadd.s32 %s17, 1
      %s25 = ssub.s32 %s17, %s24
      %p26 = scmp.eq.s32.totalorder %s25, 0
      %s28 = sadd.s32 %s27, 1
      %s29 = scalar_select %p26, %s27, %s28
      %p32 = pneg %p26
      %p33 = scmp.eq.s32.totalorder %s17, 1
      %p34 = por %p32, %p33
      %p35 = scmp.ne.s32.totalorder %s27, %s30
      %p36 = scmp.eq.s32.totalorder %s17, 0
      %p37 = por %p35, %p36
      %p38 = scmp.ne.s32.totalorder %s27, %s30
      %p39 = scmp.eq.s32.totalorder %s22, 1
      %p40 = por %p38, %p39
      %p41 = scmp.ne.s32.totalorder %s30, %s31
      %p42 = scmp.eq.s32.totalorder %s22, 0
      %p43 = por %p41, %p42
      %p44 = scmp.ne.s32.totalorder %s30, %s31
      %p45 = scmp.eq.s32.totalorder %s23, 1
      %p46 = por %p44, %p45
      %p48 = scmp.ne.s32.totalorder %s31, %s47
      %p49 = scmp.eq.s32.totalorder %s23, 0
      %p50 = por %p48, %p49
      %s52 = sadd.s32 %s51, 1
      %p55 = scmp.eq.s32.totalorder %s17, 1
      %p56 = scmp.ne.s32.totalorder %s51, %s53
      %p57 = scmp.eq.s32.totalorder %s17, 0
      %p58 = por %p56, %p57
      %p59 = scmp.ne.s32.totalorder %s51, %s53
      %p60 = scmp.eq.s32.totalorder %s22, 1
      %p61 = por %p59, %p60
      %p62 = scmp.ne.s32.totalorder %s53, %s54
      %p63 = scmp.eq.s32.totalorder %s22, 0
      %p64 = por %p62, %p63
      %p65 = scmp.ne.s32.totalorder %s53, %s54
      %p66 = scmp.eq.s32.totalorder %s23, 1
      %p67 = por %p65, %p66
      %p69 = scmp.ne.s32.totalorder %s54, %s68
      %p70 = scmp.eq.s32.totalorder %s23, 0
      %p71 = por %p69, %p70
      %s73 = sadd.s32 %s72, 1
      %p76 = scmp.eq.s32.totalorder %s17, 1
      %p77 = scmp.ne.s32.totalorder %s72, %s74
      %p78 = scmp.eq.s32.totalorder %s17, 0
      %p79 = por %p77, %p78
      %p80 = scmp.ne.s32.totalorder %s72, %s74
      %p81 = scmp.eq.s32.totalorder %s22, 1
      %p82 = por %p80, %p81
      %p83 = scmp.ne.s32.totalorder %s74, %s75
      %p84 = scmp.eq.s32.totalorder %s22, 0
      %p85 = por %p83, %p84
      %p86 = scmp.ne.s32.totalorder %s74, %s75
      %p87 = scmp.eq.s32.totalorder %s23, 1
      %p88 = por %p86, %p87
      %p90 = scmp.ne.s32.totalorder %s75, %s89
      %p91 = scmp.eq.s32.totalorder %s23, 0
      %p92 = por %p90, %p91
      %s94 = sadd.s32 %s93, 1
      %p97 = scmp.eq.s32.totalorder %s17, 1
      %p98 = scmp.ne.s32.totalorder %s93, %s95
      %p99 = scmp.eq.s32.totalorder %s17, 0
      %p100 = por %p98, %p99
      %p101 = scmp.ne.s32.totalorder %s93, %s95
      %p102 = scmp.eq.s32.totalorder %s22, 1
      %p103 = por %p101, %p102
      %p104 = scmp.ne.s32.totalorder %s95, %s96
      %p105 = scmp.eq.s32.totalorder %s22, 0
      %p106 = por %p104, %p105
      %p107 = scmp.ne.s32.totalorder %s95, %s96
      %p108 = scmp.eq.s32.totalorder %s23, 1
      %p109 = por %p107, %p108
      %p111 = scmp.ne.s32.totalorder %s96, %s110
      %p112 = scmp.eq.s32.totalorder %s23, 0
      %p113 = por %p111, %p112
      %s114 = ssub.s32 %s17, %s24
      %p115 = scmp.eq.s32.totalorder %s114, 0
      %s117 = sadd.s32 %s116, 1
      %s118 = scalar_select %p115, %s116, %s117
      %p121 = pneg %p115
      %p122 = scmp.eq.s32.totalorder %s17, 1
      %p123 = por %p121, %p122
      %p124 = scmp.ne.s32.totalorder %s116, %s119
      %p125 = scmp.eq.s32.totalorder %s17, 0
      %p126 = por %p124, %p125
      %p127 = scmp.ne.s32.totalorder %s116, %s119
      %p128 = scmp.eq.s32.totalorder %s22, 1
      %p129 = por %p127, %p128
      %p130 = scmp.ne.s32.totalorder %s119, %s120
      %p131 = scmp.eq.s32.totalorder %s22, 0
      %p132 = por %p130, %p131
      %p133 = scmp.ne.s32.totalorder %s119, %s120
      %p134 = scmp.eq.s32.totalorder %s23, 1
      %p135 = por %p133, %p134
      %p137 = scmp.ne.s32.totalorder %s120, %s136
      %p138 = scmp.eq.s32.totalorder %s23, 0
      %p139 = por %p137, %p138
      %p140 = scmp.le.s32.totalorder 1, %s17
      %p141 = scmp.lt.s32.totalorder %s17, 3
      %p142 = pnand %p140, %p141
      %p143 = pneg %p142
      // Predicated region
      $region9: #{tpu_custom_call.1} parent=5 // pred_check
        _
      $region10: #{tpu_custom_call.1} parent=5 // pred_check_branch
        %145 = sbr.rel (%p142) target = $region12
      $region11: #{tpu_custom_call.1} parent=5 // pred_region
        %s146 = ssub.s32 %s17, 1
        // Predicated region
        $region13: #{tpu_custom_call.1} parent=11 // pred_check
          %p147 = pneg %p64
        $region14: #{tpu_custom_call.1} parent=11 // pred_check_branch
          %149 = sbr.rel (%p147) target = $region16
        $region15: #{tpu_custom_call.1} parent=11 // pred_region
          %s151 = ssub.s32 3072, 3072
          %152 = vsyncadd [#allocation8], %s151
          %s153 = sshll.u32 [#allocation7], 4
          %s154 = int_to_ptr.vmem [resolvable:$true] %s153
          %159 = dma.hbm_to_vmem [thread:$0]  %s1, 3072, %s154, [#allocation8], 192, 192, 12
        $region16: #{tpu_custom_call.1} parent=11 // pred_fallthru
          _
        // Predicated region
        $region17: #{tpu_custom_call.1} parent=11 // pred_check
          %p160 = pneg %p85
        $region18: #{tpu_custom_call.1} parent=11 // pred_check_branch
          %162 = sbr.rel (%p160) target = $region20
        $region19: #{tpu_custom_call.1} parent=11 // pred_region
          _
        $region20: #{tpu_custom_call.1} parent=11 // pred_fallthru
          _
        // Predicated region
        $region21: #{tpu_custom_call.1} parent=11 // pred_check
          %p163 = pneg %p106
        $region22: #{tpu_custom_call.1} parent=11 // pred_check_branch
          %165 = sbr.rel (%p163) target = $region24
        $region23: #{tpu_custom_call.1} parent=11 // pred_region
          %s167 = ssub.s32 512, 512
          %168 = vsyncadd [#allocation8], %s167
          %s169 = sshll.u32 [#allocation9], 4
          %s170 = int_to_ptr.vmem [resolvable:$true] %s169
          %175 = dma.hbm_to_vmem [thread:$0]  %s3, 512, %s170, [#allocation8], 64, 64, 4
        $region24: #{tpu_custom_call.1} parent=11 // pred_fallthru
          _
      $region12: #{tpu_custom_call.1} parent=5 // pred_fallthru
        _
      %p176 = scmp.lt.s32.totalorder %s17, 2
      // Predicated region
      $region25: #{tpu_custom_call.1} parent=5 // pred_check
        %p177 = pneg %p176
      $region26: #{tpu_custom_call.1} parent=5 // pred_check_branch
        %179 = sbr.rel (%p177) target = $region28
      $region27: #{tpu_custom_call.1} parent=5 // pred_region
        // Predicated region
        $region29: #{tpu_custom_call.1} parent=27 // pred_check
          %p180 = pneg %p37
        $region30: #{tpu_custom_call.1} parent=27 // pred_check_branch
          %182 = sbr.rel (%p180) target = $region32
        $region31: #{tpu_custom_call.1} parent=27 // pred_region
          %s183 = sand.u32 %s27, 1
          %s184 = scalar_lea.sflag [#allocation5], %s183
          %s185 = sand.u32 %s27, 1
          %s186 = smul.addr %s185, 64
          %s187 = scalar_lea.vmem [#allocation4], %s186
          %s189 = ssub.s32 1024, 1024
          %190 = vsyncadd %s184, %s189
          %s191 = smul.addr %s17, 8
          %s192 = smul.addr %s191, 128
          %s193 = scalar_lea.hbm %s0, %s192
          %s194 = sshll.u32 %s187, 4
          %s195 = int_to_ptr.vmem [resolvable:$true] %s194
          %200 = dma.hbm_to_vmem [thread:$0]  %s193, 1024, %s195, %s184, 128, 128, 8
        $region32: #{tpu_custom_call.1} parent=27 // pred_fallthru
          _
      $region28: #{tpu_custom_call.1} parent=5 // pred_fallthru
        _
      %p201 = scmp.le.s32.totalorder 1, %s17
      %p202 = scmp.lt.s32.totalorder %s17, 3
      %p203 = pnand %p201, %p202
      %p204 = pneg %p203
      // Predicated region
      $region33: #{tpu_custom_call.1} parent=5 // pred_check
        _
      $region34: #{tpu_custom_call.1} parent=5 // pred_check_branch
        %206 = sbr.rel (%p203) target = $region36
      $region35: #{tpu_custom_call.1} parent=5 // pred_region
        %s207 = ssub.s32 %s17, 1
        %s208 = sand.u32 %s30, 1
        %s209 = scalar_lea.sflag [#allocation5], %s208
        %s210 = sand.u32 %s30, 1
        %s211 = smul.addr %s210, 64
        %s212 = scalar_lea.vmem [#allocation4], %s211
        // Predicated region
        $region37: #{tpu_custom_call.1} parent=35 // pred_check
          %p213 = pneg %p43
        $region38: #{tpu_custom_call.1} parent=35 // pred_check_branch
          %215 = sbr.rel (%p213) target = $region40
        $region39: #{tpu_custom_call.1} parent=35 // pred_region
          %216 = dma.done %s209, 1024
        $region40: #{tpu_custom_call.1} parent=35 // pred_fallthru
          _
        // Predicated region
        $region41: #{tpu_custom_call.1} parent=35 // pred_check
          %p217 = pneg %p64
        $region42: #{tpu_custom_call.1} parent=35 // pred_check_branch
          %219 = sbr.rel (%p217) target = $region44
        $region43: #{tpu_custom_call.1} parent=35 // pred_region
          %220 = dma.done [#allocation8], 3072
        $region44: #{tpu_custom_call.1} parent=35 // pred_fallthru
          _
        // Predicated region
        $region45: #{tpu_custom_call.1} parent=35 // pred_check
          %p221 = pneg %p106
        $region46: #{tpu_custom_call.1} parent=35 // pred_check_branch
          %223 = sbr.rel (%p221) target = $region48
        $region47: #{tpu_custom_call.1} parent=35 // pred_region
          %224 = dma.done [#allocation8], 512
        $region48: #{tpu_custom_call.1} parent=35 // pred_fallthru
          _
        %s225 = sand.u32 %s30, 1
        %s226 = scalar_lea.sflag [#allocation5], %s225
        %s227 = sand.u32 %s30, 1
        %s228 = smul.addr %s227, 64
        %s229 = scalar_lea.vmem [#allocation4], %s228
        %p230 = pneg %p43
        %p231 = pneg %p40
        %p232 = pneg %p64
        %p233 = pneg %p61
        %p234 = pneg %p85
        %p235 = pneg %p82
        %p236 = pneg %p106
        %p237 = pneg %p103
        %p238 = pneg %p132
        %p239 = pneg %p129
        %s240 = sand.u32 %s119, 1
        %s241 = scalar_lea.sflag [#allocation6], %s240
        %s242 = sand.u32 %s119, 1
        %s243 = smul.addr %s242, 64
        %s244 = scalar_lea.vmem [#allocation10], %s243
        %v246 = vld [vmem:[%s212] sm:$0xff]
        %v247 = vld [vmem:[%s212 + $0x8] sm:$0xff]
        %v248 = vld [vmem:[%s212 + $0x10] sm:$0xff]
        %v249 = vld [vmem:[%s212 + $0x18] sm:$0xff]
        %v250 = vld [vmem:[%s212 + $0x20] sm:$0xff]
        %v251 = vld [vmem:[%s212 + $0x28] sm:$0xff]
        %v252 = vld [vmem:[%s212 + $0x30] sm:$0xff]
        %v253 = vld [vmem:[%s212 + $0x38] sm:$0xff]
        %v254 = vpack.c.bf16 %v247, %v246
        %v255 = vpack.c.bf16 %v249, %v248
        %v256 = vpack.c.bf16 %v251, %v250
        %v257 = vpack.c.bf16 %v253, %v252
        %v258 = vld [vmem:[#allocation7] sm:$0xff]
        %v259 = vld [vmem:[#allocation7 + $0x8] sm:$0xf]
        %v260 = vld [vmem:[#allocation7 + $0xc] sm:$0xff]
        %v261 = vld [vmem:[#allocation7 + $0x14] sm:$0xf]
        %v262 = vld [vmem:[#allocation7 + $0x18] sm:$0xff]
        %v263 = vld [vmem:[#allocation7 + $0x20] sm:$0xf]
        %v264 = vld [vmem:[#allocation7 + $0x24] sm:$0xff]
        %v265 = vld [vmem:[#allocation7 + $0x2c] sm:$0xf]
        %v266 = vld [vmem:[#allocation7 + $0x30] sm:$0xff]
        %v267 = vld [vmem:[#allocation7 + $0x38] sm:$0xf]
        %v268 = vld [vmem:[#allocation7 + $0x3c] sm:$0xff]
        %v269 = vld [vmem:[#allocation7 + $0x44] sm:$0xf]
        %v270 = vld [vmem:[#allocation7 + $0x48] sm:$0xff]
        %v271 = vld [vmem:[#allocation7 + $0x50] sm:$0xf]
        %v272 = vld [vmem:[#allocation7 + $0x54] sm:$0xff]
        %v273 = vld [vmem:[#allocation7 + $0x5c] sm:$0xf]
        %v274 = vld [vmem:[#allocation7 + $0x60] sm:$0xff]
        %v275 = vld [vmem:[#allocation7 + $0x68] sm:$0xf]
        %v276 = vld [vmem:[#allocation7 + $0x6c] sm:$0xff]
        %v277 = vld [vmem:[#allocation7 + $0x74] sm:$0xf]
        %v278 = vld [vmem:[#allocation7 + $0x78] sm:$0xff]
        %v279 = vld [vmem:[#allocation7 + $0x80] sm:$0xf]
        %v280 = vld [vmem:[#allocation7 + $0x84] sm:$0xff]
        %v281 = vld [vmem:[#allocation7 + $0x8c] sm:$0xf]
        %v282 = vld [vmem:[#allocation7 + $0x90] sm:$0xff]
        %v283 = vld [vmem:[#allocation7 + $0x98] sm:$0xf]
        %v284 = vld [vmem:[#allocation7 + $0x9c] sm:$0xff]
        %v285 = vld [vmem:[#allocation7 + $0xa4] sm:$0xf]
        %v286 = vld [vmem:[#allocation7 + $0xa8] sm:$0xff]
        %v287 = vld [vmem:[#allocation7 + $0xb0] sm:$0xf]
        %v288 = vld [vmem:[#allocation7 + $0xb4] sm:$0xff]
        %v289 = vld [vmem:[#allocation7 + $0xbc] sm:$0xf]
        %v290 = vld [vmem:[%s2] sm:$0x7]
        %v292 = vlaneseq
        %v293 = vshrl.u32 %v292, 7
        %v294 = vsub.s32 0, %v293
        %v295 = vrot.slane %v290, %v294
        %v296 = vlaneseq
        %v297 = vshrl.u32 %v296, 7
        %v298 = vsub.s32 1, %v297
        %v299 = vrot.slane %v290, %v298
        %v300 = vlaneseq
        %v301 = vshrl.u32 %v300, 7
        %v302 = vsub.s32 2, %v301
        %v303 = vrot.slane %v290, %v302
        %v339 = vunpack.c.l.b16 %v258
        %v340 = vunpack.c.h.b16 %v258
        %v341 = vunpack.c.l.b16 %v259
        %v342 = vunpack.c.l.b16 %v260
        %v343 = vunpack.c.h.b16 %v260
        %v344 = vunpack.c.l.b16 %v261
        %v345 = vunpack.c.l.b16 %v262
        %v346 = vunpack.c.h.b16 %v262
        %v347 = vunpack.c.l.b16 %v263
        %v348 = vunpack.c.l.b16 %v264
        %v349 = vunpack.c.h.b16 %v264
        %v350 = vunpack.c.l.b16 %v265
        %v351 = vunpack.c.l.b16 %v266
        %v352 = vunpack.c.h.b16 %v266
        %v353 = vunpack.c.l.b16 %v267
        %v354 = vunpack.c.l.b16 %v268
        %v355 = vunpack.c.h.b16 %v268
        %v356 = vunpack.c.l.b16 %v269
        %v357 = vunpack.c.l.b16 %v270
        %v358 = vunpack.c.h.b16 %v270
        %v359 = vunpack.c.l.b16 %v271
        %v360 = vunpack.c.l.b16 %v272
        %v361 = vunpack.c.h.b16 %v272
        %v362 = vunpack.c.l.b16 %v273
        %v363 = vunpack.c.l.b16 %v274
        %v364 = vunpack.c.h.b16 %v274
        %v365 = vunpack.c.l.b16 %v275
        %v366 = vunpack.c.l.b16 %v276
        %v367 = vunpack.c.h.b16 %v276
        %v368 = vunpack.c.l.b16 %v277
        %v369 = vunpack.c.l.b16 %v278
        %v370 = vunpack.c.h.b16 %v278
        %v371 = vunpack.c.l.b16 %v279
        %v372 = vunpack.c.l.b16 %v280
        %v373 = vunpack.c.h.b16 %v280
        %v374 = vunpack.c.l.b16 %v281
        %v375 = vunpack.c.l.b16 %v282
        %v376 = vunpack.c.h.b16 %v282
        %v377 = vunpack.c.l.b16 %v283
        %v378 = vunpack.c.l.b16 %v284
        %v379 = vunpack.c.h.b16 %v284
        %v380 = vunpack.c.l.b16 %v285
        %v381 = vunpack.c.l.b16 %v286
        %v382 = vunpack.c.h.b16 %v286
        %v383 = vunpack.c.l.b16 %v287
        %v384 = vunpack.c.l.b16 %v288
        %v385 = vunpack.c.h.b16 %v288
        %v386 = vunpack.c.l.b16 %v289
        %v387 = vpack.c.b16 %v342, %v339
        %v388 = vpack.c.b16 %v343, %v340
        %v389 = vpack.c.b16 %v344, %v341
        %v390 = vpack.c.b16 %v348, %v345
        %v391 = vpack.c.b16 %v349, %v346
        %v392 = vpack.c.b16 %v350, %v347
        %v393 = vpack.c.b16 %v354, %v351
        %v394 = vpack.c.b16 %v355, %v352
        %v395 = vpack.c.b16 %v356, %v353
        %v396 = vpack.c.b16 %v360, %v357
        %v397 = vpack.c.b16 %v361, %v358
        %v398 = vpack.c.b16 %v362, %v359
        %v399 = vpack.c.b16 %v366, %v363
        %v400 = vpack.c.b16 %v367, %v364
        %v401 = vpack.c.b16 %v368, %v365
        %v402 = vpack.c.b16 %v372, %v369
        %v403 = vpack.c.b16 %v373, %v370
        %v404 = vpack.c.b16 %v374, %v371
        %v405 = vpack.c.b16 %v378, %v375
        %v406 = vpack.c.b16 %v379, %v376
        %v407 = vpack.c.b16 %v380, %v377
        %v408 = vpack.c.b16 %v384, %v381
        %v409 = vpack.c.b16 %v385, %v382
        %v410 = vpack.c.b16 %v386, %v383
        %435 = vmatprep.subr.bf16.mxu0 %v409
        %436 = vmatpush1.bf16.msra.mxu0 %v408
        %437 = vmatprep.subr.bf16.mxu0 %v406
        %438 = vmatpush1.bf16.msra.mxu0 %v405
        %439 = vmatprep.subr.bf16.mxu0 %v403
        %440 = vmatpush1.bf16.msra.mxu0 %v402
        %441 = vmatprep.subr.bf16.mxu0 %v400
        %442 = vmatpush1.bf16.msra.mxu0 %v399
        %443 = vmatprep.subr.bf16.mxu0 %v397
        %444 = vmatpush1.bf16.msra.mxu0 %v396
        %445 = vmatprep.subr.bf16.mxu0 %v394
        %446 = vmatpush1.bf16.msra.mxu0 %v393
        %447 = vmatprep.subr.bf16.mxu0 %v391
        %448 = vmatpush1.bf16.msra.mxu0 %v390
        %449 = vmatprep.subr.bf16.mxu0 %v388
        %450 = vmatpush1.bf16.msra.mxu0 %v387
        %451 = vmatprep.subr.bf16.mxu0 0
        %452 = vmatpush2.bf16.msra.mxu0 0
        %453 = vmatprep.subr.bf16.mxu0 0
        %454 = vmatpush2.bf16.msra.mxu0 0
        %455 = vmatprep.subr.bf16.mxu0 0
        %456 = vmatpush2.bf16.msra.mxu0 0
        %457 = vmatprep.subr.bf16.mxu0 0
        %458 = vmatpush2.bf16.msra.mxu0 0
        %459 = vmatprep.subr.bf16.mxu0 0
        %460 = vmatpush2.bf16.msra.mxu0 0
        %461 = vmatprep.subr.bf16.mxu0 0
        %462 = vmatpush2.bf16.msra.mxu0 0
        %463 = vmatprep.subr.bf16.mxu0 0
        %464 = vmatpush2.bf16.msra.mxu0 0
        %465 = vmatprep.subr.bf16.mxu0 0
        %466 = vmatpush2.bf16.msra.mxu0 0
        %467 = vmatprep.mubr.bf16.mxu0 0
        %468 = vmatmul.mubr.bf16.gmra.mxu0 %v254
        %v469 = vpop.f32.mrf.mxu0
        %v470 = vadd.f32 %v295, %v469
        %v471 = vpop.f32.mrf.mxu0
        %v472 = vadd.f32 %v299, %v471
        %v473 = vpop.f32.mrf.mxu0
        %v474 = vadd.f32 %v295, %v473
        %v475 = vpop.f32.mrf.mxu0
        %v476 = vadd.f32 %v299, %v475
        %477 = vmatprep.mubr.bf16.mxu0 0
        %478 = vmatmul.mubr.bf16.gmra.mxu0 %v255
        %v479 = vpop.f32.mrf.mxu0
        %v480 = vadd.f32 %v295, %v479
        %v481 = vpop.f32.mrf.mxu0
        %v482 = vadd.f32 %v299, %v481
        %v483 = vpop.f32.mrf.mxu0
        %v484 = vadd.f32 %v295, %v483
        %v485 = vpop.f32.mrf.mxu0
        %v486 = vadd.f32 %v299, %v485
        %487 = vmatprep.mubr.bf16.mxu0 0
        %488 = vmatmul.mubr.bf16.gmra.mxu0 %v256
        %v489 = vpop.f32.mrf.mxu0
        %v490 = vadd.f32 %v295, %v489
        %v491 = vpop.f32.mrf.mxu0
        %v492 = vadd.f32 %v299, %v491
        %v493 = vpop.f32.mrf.mxu0
        %v494 = vadd.f32 %v295, %v493
        %v495 = vpop.f32.mrf.mxu0
        %v496 = vadd.f32 %v299, %v495
        %497 = vmatprep.mubr.bf16.mxu0 0
        %498 = vmatmul.mubr.bf16.gmra.mxu0 %v257
        %v499 = vpop.f32.mrf.mxu0
        %v500 = vadd.f32 %v295, %v499
        %v501 = vpop.f32.mrf.mxu0
        %v502 = vadd.f32 %v299, %v501
        %v503 = vpop.f32.mrf.mxu0
        %v504 = vadd.f32 %v295, %v503
        %v505 = vpop.f32.mrf.mxu0
        %v506 = vadd.f32 %v299, %v505
        %507 = vdwg.mxu0
        %508 = vmatprep.subr.bf16.mxu0 0
        %509 = vmatpush1.bf16.msra.mxu0 %v410
        %510 = vmatprep.subr.bf16.mxu0 0
        %511 = vmatpush1.bf16.msra.mxu0 %v407
        %512 = vmatprep.subr.bf16.mxu0 0
        %513 = vmatpush1.bf16.msra.mxu0 %v404
        %514 = vmatprep.subr.bf16.mxu0 0
        %515 = vmatpush1.bf16.msra.mxu0 %v401
        %516 = vmatprep.subr.bf16.mxu0 0
        %517 = vmatpush1.bf16.msra.mxu0 %v398
        %518 = vmatprep.subr.bf16.mxu0 0
        %519 = vmatpush1.bf16.msra.mxu0 %v395
        %520 = vmatprep.subr.bf16.mxu0 0
        %521 = vmatpush1.bf16.msra.mxu0 %v392
        %522 = vmatprep.subr.bf16.mxu0 0
        %523 = vmatpush1.bf16.msra.mxu0 %v389
        %524 = vmatprep.subr.bf16.mxu0 0
        %525 = vmatpush2.bf16.msra.mxu0 0
        %526 = vmatprep.subr.bf16.mxu0 0
        %527 = vmatpush2.bf16.msra.mxu0 0
        %528 = vmatprep.subr.bf16.mxu0 0
        %529 = vmatpush2.bf16.msra.mxu0 0
        %530 = vmatprep.subr.bf16.mxu0 0
        %531 = vmatpush2.bf16.msra.mxu0 0
        %532 = vmatprep.subr.bf16.mxu0 0
        %533 = vmatpush2.bf16.msra.mxu0 0
        %534 = vmatprep.subr.bf16.mxu0 0
        %535 = vmatpush2.bf16.msra.mxu0 0
        %536 = vmatprep.subr.bf16.mxu0 0
        %537 = vmatpush2.bf16.msra.mxu0 0
        %538 = vmatprep.subr.bf16.mxu0 0
        %539 = vmatpush2.bf16.msra.mxu0 0
        %540 = vmatprep.mubr.bf16.mxu0 0
        %541 = vmatmul.mubr.bf16.gmra.mxu0 %v254
        %v542 = vpop.f32.mrf.mxu0
        %v543 = vadd.f32 %v303, %v542
        %v544 = vpop.f32.mrf.mxu0
        %v545 = vpop.f32.mrf.mxu0
        %v546 = vadd.f32 %v303, %v545
        %v547 = vpop.f32.mrf.mxu0
        %548 = vmatprep.mubr.bf16.mxu0 0
        %549 = vmatmul.mubr.bf16.gmra.mxu0 %v255
        %v550 = vpop.f32.mrf.mxu0
        %v551 = vadd.f32 %v303, %v550
        %v552 = vpop.f32.mrf.mxu0
        %v553 = vpop.f32.mrf.mxu0
        %v554 = vadd.f32 %v303, %v553
        %v555 = vpop.f32.mrf.mxu0
        %556 = vmatprep.mubr.bf16.mxu0 0
        %557 = vmatmul.mubr.bf16.gmra.mxu0 %v256
        %v558 = vpop.f32.mrf.mxu0
        %v559 = vadd.f32 %v303, %v558
        %v560 = vpop.f32.mrf.mxu0
        %v561 = vpop.f32.mrf.mxu0
        %v562 = vadd.f32 %v303, %v561
        %v563 = vpop.f32.mrf.mxu0
        %564 = vmatprep.mubr.bf16.mxu0 0
        %565 = vmatmul.mubr.bf16.gmra.mxu0 %v257
        %v566 = vpop.f32.mrf.mxu0
        %v567 = vadd.f32 %v303, %v566
        %v568 = vpop.f32.mrf.mxu0
        %v569 = vpop.f32.mrf.mxu0
        %v570 = vadd.f32 %v303, %v569
        %v571 = vpop.f32.mrf.mxu0
        %572 = vdwg.mxu0
        %v573 = vpack.c.bf16 %v474, %v470
        %v574 = vpack.c.bf16 %v476, %v472
        %v575 = vpack.c.bf16 %v546, %v543
        %v576 = vpack.c.bf16 %v484, %v480
        %v577 = vpack.c.bf16 %v486, %v482
        %v578 = vpack.c.bf16 %v554, %v551
        %v579 = vpack.c.bf16 %v494, %v490
        %v580 = vpack.c.bf16 %v496, %v492
        %v581 = vpack.c.bf16 %v562, %v559
        %v582 = vpack.c.bf16 %v504, %v500
        %v583 = vpack.c.bf16 %v506, %v502
        %v584 = vpack.c.bf16 %v570, %v567
        %v597 = vunpack.c.l.b16 %v573
        %v598 = vunpack.c.l.b16 %v574
        %v599 = vunpack.c.l.b16 %v575
        %v600 = vunpack.c.h.b16 %v573
        %v601 = vunpack.c.h.b16 %v574
        %v602 = vunpack.c.h.b16 %v575
        %v603 = vunpack.c.l.b16 %v576
        %v604 = vunpack.c.l.b16 %v577
        %v605 = vunpack.c.l.b16 %v578
        %v606 = vunpack.c.h.b16 %v576
        %v607 = vunpack.c.h.b16 %v577
        %v608 = vunpack.c.h.b16 %v578
        %v609 = vunpack.c.l.b16 %v579
        %v610 = vunpack.c.l.b16 %v580
        %v611 = vunpack.c.l.b16 %v581
        %v612 = vunpack.c.h.b16 %v579
        %v613 = vunpack.c.h.b16 %v580
        %v614 = vunpack.c.h.b16 %v581
        %v615 = vunpack.c.l.b16 %v582
        %v616 = vunpack.c.l.b16 %v583
        %v617 = vunpack.c.l.b16 %v584
        %v618 = vunpack.c.h.b16 %v582
        %v619 = vunpack.c.h.b16 %v583
        %v620 = vunpack.c.h.b16 %v584
        %v621 = vpack.c.b16 %v598, %v597
        %v622 = vpack.c.b16 %v599, %v599
        %v623 = vpack.c.b16 %v601, %v600
        %v624 = vpack.c.b16 %v602, %v602
        %v625 = vpack.c.b16 %v604, %v603
        %v626 = vpack.c.b16 %v605, %v605
        %v627 = vpack.c.b16 %v607, %v606
        %v628 = vpack.c.b16 %v608, %v608
        %v629 = vpack.c.b16 %v610, %v609
        %v630 = vpack.c.b16 %v611, %v611
        %v631 = vpack.c.b16 %v613, %v612
        %v632 = vpack.c.b16 %v614, %v614
        %v633 = vpack.c.b16 %v616, %v615
        %v634 = vpack.c.b16 %v617, %v617
        %v635 = vpack.c.b16 %v619, %v618
        %v636 = vpack.c.b16 %v620, %v620
        %653 = vst [vmem:[#allocation2] sm:$0xff] %v621
        %654 = vst [vmem:[#allocation2 + $0x8] sm:$0xf] %v622
        %655 = vst [vmem:[#allocation2 + $0xc] sm:$0xff] %v623
        %656 = vst [vmem:[#allocation2 + $0x14] sm:$0xf] %v624
        %657 = vst [vmem:[#allocation2 + $0x18] sm:$0xff] %v625
        %658 = vst [vmem:[#allocation2 + $0x20] sm:$0xf] %v626
        %659 = vst [vmem:[#allocation2 + $0x24] sm:$0xff] %v627
        %660 = vst [vmem:[#allocation2 + $0x2c] sm:$0xf] %v628
        %661 = vst [vmem:[#allocation2 + $0x30] sm:$0xff] %v629
        %662 = vst [vmem:[#allocation2 + $0x38] sm:$0xf] %v630
        %663 = vst [vmem:[#allocation2 + $0x3c] sm:$0xff] %v631
        %664 = vst [vmem:[#allocation2 + $0x44] sm:$0xf] %v632
        %665 = vst [vmem:[#allocation2 + $0x48] sm:$0xff] %v633
        %666 = vst [vmem:[#allocation2 + $0x50] sm:$0xf] %v634
        %667 = vst [vmem:[#allocation2 + $0x54] sm:$0xff] %v635
        %668 = vst [vmem:[#allocation2 + $0x5c] sm:$0xf] %v636
        %v669 = vld [vmem:[#allocation9] sm:$0xf]
        %v670 = vld [vmem:[#allocation9 + $0x4] sm:$0xf]
        %v671 = vld [vmem:[#allocation9 + $0x8] sm:$0xf]
        %v672 = vld [vmem:[#allocation9 + $0xc] sm:$0xf]
        %v673 = vld [vmem:[#allocation9 + $0x10] sm:$0xf]
        %v674 = vld [vmem:[#allocation9 + $0x14] sm:$0xf]
        %v675 = vld [vmem:[#allocation9 + $0x18] sm:$0xf]
        %v676 = vld [vmem:[#allocation9 + $0x1c] sm:$0xf]
        %677 = vst [vmem:[#allocation3 + $0x4] sm:$0xf] %v669
        %678 = vst [vmem:[#allocation3 + $0xc] sm:$0xf] %v670
        %679 = vst [vmem:[#allocation3 + $0x14] sm:$0xf] %v671
        %680 = vst [vmem:[#allocation3 + $0x1c] sm:$0xf] %v672
        %681 = vst [vmem:[#allocation3 + $0x24] sm:$0xf] %v673
        %682 = vst [vmem:[#allocation3 + $0x2c] sm:$0xf] %v674
        %683 = vst [vmem:[#allocation3 + $0x34] sm:$0xf] %v675
        %684 = vst [vmem:[#allocation3 + $0x3c] sm:$0xf] %v676
        %s685 = smul.u32 0, 3
        %s686 = smul.addr %s685, 4
        %s687 = scalar_lea.vmem [#allocation2], %s686
        %v688 = vld [vmem:[%s687] sm:$0xff]
        %v689 = vld [vmem:[%s687 + $0x8] sm:$0xf]
        %v690 = vld [vmem:[%s687 + $0xc] sm:$0xff]
        %v691 = vld [vmem:[%s687 + $0x14] sm:$0xf]
        %v692 = vld [vmem:[%s687 + $0x18] sm:$0xff]
        %v693 = vld [vmem:[%s687 + $0x20] sm:$0xf]
        %v694 = vld [vmem:[%s687 + $0x24] sm:$0xff]
        %v695 = vld [vmem:[%s687 + $0x2c] sm:$0xf]
        %v696 = vld [vmem:[%s687 + $0x30] sm:$0xff]
        %v697 = vld [vmem:[%s687 + $0x38] sm:$0xf]
        %v698 = vld [vmem:[%s687 + $0x3c] sm:$0xff]
        %v699 = vld [vmem:[%s687 + $0x44] sm:$0xf]
        %v700 = vld [vmem:[%s687 + $0x48] sm:$0xff]
        %v701 = vld [vmem:[%s687 + $0x50] sm:$0xf]
        %v702 = vld [vmem:[%s687 + $0x54] sm:$0xff]
        %v703 = vld [vmem:[%s687 + $0x5c] sm:$0xf]
        %v712 = vrot.slane %v688, 4
        %v713 = vrot.slane %v690, 4
        %v714 = vrot.slane %v692, 4
        %v715 = vrot.slane %v694, 4
        %v716 = vrot.slane %v696, 4
        %v717 = vrot.slane %v698, 4
        %v718 = vrot.slane %v700, 4
        %v719 = vrot.slane %v702, 4
        %728 = vst [vmem:[#allocation3] sm:$0xf] %v712
        %729 = vst [vmem:[#allocation3 + $0x8] sm:$0xf] %v713
        %730 = vst [vmem:[#allocation3 + $0x10] sm:$0xf] %v714
        %731 = vst [vmem:[#allocation3 + $0x18] sm:$0xf] %v715
        %732 = vst [vmem:[#allocation3 + $0x20] sm:$0xf] %v716
        %733 = vst [vmem:[#allocation3 + $0x28] sm:$0xf] %v717
        %734 = vst [vmem:[#allocation3 + $0x30] sm:$0xf] %v718
        %735 = vst [vmem:[#allocation3 + $0x38] sm:$0xf] %v719
        %v736 = vld [vmem:[#allocation3] sm:$0xff]
        %v737 = vld [vmem:[#allocation3 + $0x8] sm:$0xff]
        %v738 = vld [vmem:[#allocation3 + $0x10] sm:$0xff]
        %v739 = vld [vmem:[#allocation3 + $0x18] sm:$0xff]
        %v740 = vld [vmem:[#allocation3 + $0x20] sm:$0xff]
        %v741 = vld [vmem:[#allocation3 + $0x28] sm:$0xff]
        %v742 = vld [vmem:[#allocation3 + $0x30] sm:$0xff]
        %v743 = vld [vmem:[#allocation3 + $0x38] sm:$0xff]
        %v752 = vunpack.c.l.b16 %v736
        %v753 = vunpack.c.h.b16 %v736
        %v754 = vunpack.c.l.b16 %v737
        %v755 = vunpack.c.h.b16 %v737
        %v756 = vunpack.c.l.b16 %v738
        %v757 = vunpack.c.h.b16 %v738
        %v758 = vunpack.c.l.b16 %v739
        %v759 = vunpack.c.h.b16 %v739
        %v760 = vunpack.c.l.b16 %v740
        %v761 = vunpack.c.h.b16 %v740
        %v762 = vunpack.c.l.b16 %v741
        %v763 = vunpack.c.h.b16 %v741
        %v764 = vunpack.c.l.b16 %v742
        %v765 = vunpack.c.h.b16 %v742
        %v766 = vunpack.c.l.b16 %v743
        %v767 = vunpack.c.h.b16 %v743
        %v768 = vpack.c.b16 %v754, %v752
        %v769 = vpack.c.b16 %v755, %v753
        %v770 = vpack.c.b16 %v758, %v756
        %v771 = vpack.c.b16 %v759, %v757
        %v772 = vpack.c.b16 %v762, %v760
        %v773 = vpack.c.b16 %v763, %v761
        %v774 = vpack.c.b16 %v766, %v764
        %v775 = vpack.c.b16 %v767, %v765
        %v784 = vunpack.c.l.b16 %v688
        %v785 = vunpack.c.h.b16 %v688
        %v786 = vunpack.c.l.b16 %v690
        %v787 = vunpack.c.h.b16 %v690
        %v788 = vunpack.c.l.b16 %v692
        %v789 = vunpack.c.h.b16 %v692
        %v790 = vunpack.c.l.b16 %v694
        %v791 = vunpack.c.h.b16 %v694
        %v792 = vunpack.c.l.b16 %v696
        %v793 = vunpack.c.h.b16 %v696
        %v794 = vunpack.c.l.b16 %v698
        %v795 = vunpack.c.h.b16 %v698
        %v796 = vunpack.c.l.b16 %v700
        %v797 = vunpack.c.h.b16 %v700
        %v798 = vunpack.c.l.b16 %v702
        %v799 = vunpack.c.h.b16 %v702
        %v800 = vpack.c.b16 %v786, %v784
        %v801 = vpack.c.b16 %v787, %v785
        %v802 = vpack.c.b16 %v790, %v788
        %v803 = vpack.c.b16 %v791, %v789
        %v804 = vpack.c.b16 %v794, %v792
        %v805 = vpack.c.b16 %v795, %v793
        %v806 = vpack.c.b16 %v798, %v796
        %v807 = vpack.c.b16 %v799, %v797
        %816 = vmatprep.subr.bf16.mxu0 0
        %817 = vmatpush1.bf16.xpose.msra.mxu0 0
        %818 = vmatprep.subr.bf16.mxu0 0
        %819 = vmatpush1.bf16.xpose.msra.mxu0 0
        %820 = vmatprep.subr.bf16.mxu0 0
        %821 = vmatpush1.bf16.xpose.msra.mxu0 0
        %822 = vmatprep.subr.bf16.mxu0 0
        %823 = vmatpush1.bf16.xpose.msra.mxu0 0
        %824 = vmatprep.subr.bf16.mxu0 %v807
        %825 = vmatpush1.bf16.xpose.msra.mxu0 %v806
        %826 = vmatprep.subr.bf16.mxu0 %v805
        %827 = vmatpush1.bf16.xpose.msra.mxu0 %v804
        %828 = vmatprep.subr.bf16.mxu0 %v803
        %829 = vmatpush1.bf16.xpose.msra.mxu0 %v802
        %830 = vmatprep.subr.bf16.mxu0 %v801
        %831 = vmatpush1.bf16.xpose.msra.mxu0 %v800
        %832 = vmatprep.subr.bf16.mxu0 0
        %833 = vmatpush2.bf16.xpose.msra.mxu0 0
        %834 = vmatprep.subr.bf16.mxu0 0
        %835 = vmatpush2.bf16.xpose.msra.mxu0 0
        %836 = vmatprep.subr.bf16.mxu0 0
        %837 = vmatpush2.bf16.xpose.msra.mxu0 0
        %838 = vmatprep.subr.bf16.mxu0 0
        %839 = vmatpush2.bf16.xpose.msra.mxu0 0
        %840 = vmatprep.subr.bf16.mxu0 0
        %841 = vmatpush2.bf16.xpose.msra.mxu0 0
        %842 = vmatprep.subr.bf16.mxu0 0
        %843 = vmatpush2.bf16.xpose.msra.mxu0 0
        %844 = vmatprep.subr.bf16.mxu0 0
        %845 = vmatpush2.bf16.xpose.msra.mxu0 0
        %846 = vmatprep.subr.bf16.mxu0 0
        %847 = vmatpush2.bf16.xpose.msra.mxu0 0
        %848 = vmatprep.mubr.bf16.mxu0 %v769
        %849 = vmatmul.mubr.bf16.gmra.mxu0 %v768
        %v850 = vpop.f32.mrf.mxu0
        %v851 = vadd.f32 0.0, %v850
        %v852 = vpop.f32.mrf.mxu0
        %v853 = vpop.f32.mrf.mxu0
        %v854 = vadd.f32 0.0, %v853
        %v855 = vpop.f32.mrf.mxu0
        %856 = vmatprep.mubr.bf16.mxu0 %v771
        %857 = vmatmul.mubr.bf16.gmra.mxu0 %v770
        %v858 = vpop.f32.mrf.mxu0
        %v859 = vadd.f32 0.0, %v858
        %v860 = vpop.f32.mrf.mxu0
        %v861 = vpop.f32.mrf.mxu0
        %v862 = vadd.f32 0.0, %v861
        %v863 = vpop.f32.mrf.mxu0
        %864 = vmatprep.mubr.bf16.mxu0 %v773
        %865 = vmatmul.mubr.bf16.gmra.mxu0 %v772
        %v866 = vpop.f32.mrf.mxu0
        %v867 = vadd.f32 0.0, %v866
        %v868 = vpop.f32.mrf.mxu0
        %v869 = vpop.f32.mrf.mxu0
        %v870 = vadd.f32 0.0, %v869
        %v871 = vpop.f32.mrf.mxu0
        %872 = vmatprep.mubr.bf16.mxu0 %v775
        %873 = vmatmul.mubr.bf16.gmra.mxu0 %v774
        %v874 = vpop.f32.mrf.mxu0
        %v875 = vadd.f32 0.0, %v874
        %v876 = vpop.f32.mrf.mxu0
        %v877 = vpop.f32.mrf.mxu0
        %v878 = vadd.f32 0.0, %v877
        %v879 = vpop.f32.mrf.mxu0
        %880 = vdwg.mxu0
        %vm881 = vcmask 523264
        %v882 = vsel %vm881, %v851, -inf
        %883 = vmax.xlane.f32.xlu0 %v882
        %v884 = vpop.xlane.xlu0 %883
        %v885 = vsel %vm881, %v854, -inf
        %886 = vmax.xlane.f32.xlu0 %v885
        %v887 = vpop.xlane.xlu0 %886
        %v888 = vsel %vm881, %v859, -inf
        %889 = vmax.xlane.f32.xlu0 %v888
        %v890 = vpop.xlane.xlu0 %889
        %v891 = vsel %vm881, %v862, -inf
        %892 = vmax.xlane.f32.xlu0 %v891
        %v893 = vpop.xlane.xlu0 %892
        %v894 = vsel %vm881, %v867, -inf
        %895 = vmax.xlane.f32.xlu0 %v894
        %v896 = vpop.xlane.xlu0 %895
        %v897 = vsel %vm881, %v870, -inf
        %898 = vmax.xlane.f32.xlu0 %v897
        %v899 = vpop.xlane.xlu0 %898
        %v900 = vsel %vm881, %v875, -inf
        %901 = vmax.xlane.f32.xlu0 %v900
        %v902 = vpop.xlane.xlu0 %901
        %v903 = vsel %vm881, %v878, -inf
        %904 = vmax.xlane.f32.xlu0 %v903
        %v905 = vpop.xlane.xlu0 %904
        %v906 = vsub.f32 %v851, %v884
        %v907 = vsub.f32 %v854, %v887
        %v908 = vsub.f32 %v859, %v890
        %v909 = vsub.f32 %v862, %v893
        %v910 = vsub.f32 %v867, %v896
        %v911 = vsub.f32 %v870, %v899
        %v912 = vsub.f32 %v875, %v902
        %v913 = vsub.f32 %v878, %v905
        %v914 = vmul.f32 %v906, 1.442695
        %v915 = vpow.pop %v914
        %v916 = vmul.f32 %v907, 1.442695
        %v917 = vpow.pop %v916
        %v918 = vmul.f32 %v908, 1.442695
        %v919 = vpow.pop %v918
        %v920 = vmul.f32 %v909, 1.442695
        %v921 = vpow.pop %v920
        %v922 = vmul.f32 %v910, 1.442695
        %v923 = vpow.pop %v922
        %v924 = vmul.f32 %v911, 1.442695
        %v925 = vpow.pop %v924
        %v926 = vmul.f32 %v912, 1.442695
        %v927 = vpow.pop %v926
        %v928 = vmul.f32 %v913, 1.442695
        %v929 = vpow.pop %v928
        %v930 = vsel %vm881, %v915, 0.0
        %931 = vadd.xlane.f32.xlu0 %v930
        %v932 = vpop.xlane.xlu0 %931
        %v933 = vsel %vm881, %v917, 0.0
        %934 = vadd.xlane.f32.xlu0 %v933
        %v935 = vpop.xlane.xlu0 %934
        %v936 = vsel %vm881, %v919, 0.0
        %937 = vadd.xlane.f32.xlu0 %v936
        %v938 = vpop.xlane.xlu0 %937
        %v939 = vsel %vm881, %v921, 0.0
        %940 = vadd.xlane.f32.xlu0 %v939
        %v941 = vpop.xlane.xlu0 %940
        %v942 = vsel %vm881, %v923, 0.0
        %943 = vadd.xlane.f32.xlu0 %v942
        %v944 = vpop.xlane.xlu0 %943
        %v945 = vsel %vm881, %v925, 0.0
        %946 = vadd.xlane.f32.xlu0 %v945
        %v947 = vpop.xlane.xlu0 %946
        %v948 = vsel %vm881, %v927, 0.0
        %949 = vadd.xlane.f32.xlu0 %v948
        %v950 = vpop.xlane.xlu0 %949
        %v951 = vsel %vm881, %v929, 0.0
        %952 = vadd.xlane.f32.xlu0 %v951
        %v953 = vpop.xlane.xlu0 %952
        %v954 = vrcp.pop %v932
        %v955 = vrcp.pop %v935
        %v956 = vrcp.pop %v938
        %v957 = vrcp.pop %v941
        %v958 = vrcp.pop %v944
        %v959 = vrcp.pop %v947
        %v960 = vrcp.pop %v950
        %v961 = vrcp.pop %v953
        %v962 = vpack.c.bf16 %v917, %v915
        %v963 = vpack.c.bf16 %v921, %v919
        %v964 = vpack.c.bf16 %v925, %v923
        %v965 = vpack.c.bf16 %v929, %v927
        %v974 = vunpack.c.l.b16 %v689
        %v975 = vunpack.c.l.b16 %v691
        %v976 = vunpack.c.l.b16 %v693
        %v977 = vunpack.c.l.b16 %v695
        %v978 = vunpack.c.l.b16 %v697
        %v979 = vunpack.c.l.b16 %v699
        %v980 = vunpack.c.l.b16 %v701
        %v981 = vunpack.c.l.b16 %v703
        %v982 = vpack.c.b16 %v975, %v974
        %v983 = vpack.c.b16 %v977, %v976
        %v984 = vpack.c.b16 %v979, %v978
        %v985 = vpack.c.b16 %v981, %v980
        %v991 = vsel %vm881, %v962, 0
        %v994 = vsel %vm881, %v963, 0
        %v997 = vsel %vm881, %v964, 0
        %v1000 = vsel %vm881, %v965, 0
        %1002 = vmatprep.subr.bf16.mxu0 0
        %1003 = vmatpush1.bf16.msra.mxu0 0
        %1004 = vmatprep.subr.bf16.mxu0 0
        %1005 = vmatpush1.bf16.msra.mxu0 0
        %1006 = vmatprep.subr.bf16.mxu0 0
        %1007 = vmatpush1.bf16.msra.mxu0 0
        %1008 = vmatprep.subr.bf16.mxu0 0
        %1009 = vmatpush1.bf16.msra.mxu0 0
        %1010 = vmatprep.subr.bf16.mxu0 0
        %1011 = vmatpush1.bf16.msra.mxu0 %v985
        %1012 = vmatprep.subr.bf16.mxu0 0
        %1013 = vmatpush1.bf16.msra.mxu0 %v984
        %1014 = vmatprep.subr.bf16.mxu0 0
        %1015 = vmatpush1.bf16.msra.mxu0 %v983
        %1016 = vmatprep.subr.bf16.mxu0 0
        %1017 = vmatpush1.bf16.msra.mxu0 %v982
        %1018 = vmatprep.subr.bf16.mxu0 0
        %1019 = vmatpush2.bf16.msra.mxu0 0
        %1020 = vmatprep.subr.bf16.mxu0 0
        %1021 = vmatpush2.bf16.msra.mxu0 0
        %1022 = vmatprep.subr.bf16.mxu0 0
        %1023 = vmatpush2.bf16.msra.mxu0 0
        %1024 = vmatprep.subr.bf16.mxu0 0
        %1025 = vmatpush2.bf16.msra.mxu0 0
        %1026 = vmatprep.subr.bf16.mxu0 0
        %1027 = vmatpush2.bf16.msra.mxu0 0
        %1028 = vmatprep.subr.bf16.mxu0 0
        %1029 = vmatpush2.bf16.msra.mxu0 0
        %1030 = vmatprep.subr.bf16.mxu0 0
        %1031 = vmatpush2.bf16.msra.mxu0 0
        %1032 = vmatprep.subr.bf16.mxu0 0
        %1033 = vmatpush2.bf16.msra.mxu0 0
        %1034 = vmatprep.mubr.bf16.mxu0 0
        %1035 = vmatmul.mubr.bf16.gmra.mxu0 %v991
        %v1036 = vpop.f32.mrf.mxu0
        %v1037 = vadd.f32 0.0, %v1036
        %v1038 = vpop.f32.mrf.mxu0
        %v1039 = vpop.f32.mrf.mxu0
        %v1040 = vadd.f32 0.0, %v1039
        %v1041 = vpop.f32.mrf.mxu0
        %1042 = vmatprep.mubr.bf16.mxu0 0
        %1043 = vmatmul.mubr.bf16.gmra.mxu0 %v994
        %v1044 = vpop.f32.mrf.mxu0
        %v1045 = vadd.f32 0.0, %v1044
        %v1046 = vpop.f32.mrf.mxu0
        %v1047 = vpop.f32.mrf.mxu0
        %v1048 = vadd.f32 0.0, %v1047
        %v1049 = vpop.f32.mrf.mxu0
        %1050 = vmatprep.mubr.bf16.mxu0 0
        %1051 = vmatmul.mubr.bf16.gmra.mxu0 %v997
        %v1052 = vpop.f32.mrf.mxu0
        %v1053 = vadd.f32 0.0, %v1052
        %v1054 = vpop.f32.mrf.mxu0
        %v1055 = vpop.f32.mrf.mxu0
        %v1056 = vadd.f32 0.0, %v1055
        %v1057 = vpop.f32.mrf.mxu0
        %1058 = vmatprep.mubr.bf16.mxu0 0
        %1059 = vmatmul.mubr.bf16.gmra.mxu0 %v1000
        %v1060 = vpop.f32.mrf.mxu0
        %v1061 = vadd.f32 0.0, %v1060
        %v1062 = vpop.f32.mrf.mxu0
        %v1063 = vpop.f32.mrf.mxu0
        %v1064 = vadd.f32 0.0, %v1063
        %v1065 = vpop.f32.mrf.mxu0
        %1066 = vdwg.mxu0
        %v1067 = vmul.f32 %v1037, %v954
        %v1068 = vmul.f32 %v1040, %v955
        %v1069 = vmul.f32 %v1045, %v956
        %v1070 = vmul.f32 %v1048, %v957
        %v1071 = vmul.f32 %v1053, %v958
        %v1072 = vmul.f32 %v1056, %v959
        %v1073 = vmul.f32 %v1061, %v960
        %v1074 = vmul.f32 %v1064, %v961
        %1075 = vst [vmem:[%s244] sm:$0xff] %v1067
        %1076 = vst [vmem:[%s244 + $0x8] sm:$0xff] %v1068
        %1077 = vst [vmem:[%s244 + $0x10] sm:$0xff] %v1069
        %1078 = vst [vmem:[%s244 + $0x18] sm:$0xff] %v1070
        %1079 = vst [vmem:[%s244 + $0x20] sm:$0xff] %v1071
        %1080 = vst [vmem:[%s244 + $0x28] sm:$0xff] %v1072
        %1081 = vst [vmem:[%s244 + $0x30] sm:$0xff] %v1073
        %1082 = vst [vmem:[%s244 + $0x38] sm:$0xff] %v1074
        %s1083 = sand.u32 %s119, 1
        %s1084 = scalar_lea.sflag [#allocation6], %s1083
        %s1085 = sand.u32 %s119, 1
        %s1086 = smul.addr %s1085, 64
        %s1087 = scalar_lea.vmem [#allocation10], %s1086
        // Predicated region
        $region49: #{tpu_custom_call.1} parent=35 // pred_check
          %p1088 = pneg %p129
        $region50: #{tpu_custom_call.1} parent=35 // pred_check_branch
          %1090 = sbr.rel (%p1088) target = $region52
        $region51: #{tpu_custom_call.1} parent=35 // pred_region
          %s1092 = ssub.s32 1024, 1024
          %1093 = vsyncadd %s1084, %s1092
          %s1094 = smul.addr %s22, 8
          %s1095 = smul.addr %s1094, 128
          %s1096 = scalar_lea.hbm %s4, %s1095
          %s1097 = sshll.u32 %s1087, 4
          %s1098 = int_to_ptr.vmem [resolvable:$true] %s1097
          %1103 = dma.vmem_to_hbm [thread:$0]  %s1098, 1024, %s1096, %s1084, 128, 128, 8
        $region52: #{tpu_custom_call.1} parent=35 // pred_fallthru
          _
      $region36: #{tpu_custom_call.1} parent=5 // pred_fallthru
        _
      %p1104 = scmp.le.s32.totalorder 2, %s17
      // Predicated region
      $region53: #{tpu_custom_call.1} parent=5 // pred_check
        %p1105 = pneg %p1104
      $region54: #{tpu_custom_call.1} parent=5 // pred_check_branch
        %1107 = sbr.rel (%p1105) target = $region56
      $region55: #{tpu_custom_call.1} parent=5 // pred_region
        %s1108 = ssub.s32 %s17, 2
        // Predicated region
        $region57: #{tpu_custom_call.1} parent=55 // pred_check
          %p1109 = pneg %p135
        $region58: #{tpu_custom_call.1} parent=55 // pred_check_branch
          %1111 = sbr.rel (%p1109) target = $region60
        $region59: #{tpu_custom_call.1} parent=55 // pred_region
          %s1112 = sand.u32 %s120, 1
          %s1113 = scalar_lea.sflag [#allocation6], %s1112
          %s1114 = sand.u32 %s120, 1
          %s1115 = smul.addr %s1114, 64
          %s1116 = scalar_lea.vmem [#allocation10], %s1115
          %1117 = dma.done %s1113, 1024
        $region60: #{tpu_custom_call.1} parent=55 // pred_fallthru
          _
      $region56: #{tpu_custom_call.1} parent=5 // pred_fallthru
        _
    $region6: #{tpu_custom_call.1} parent=1 // loop_footer
      %s21 = sadd.s32 1, %s17
    $region7: #{tpu_custom_call.1} parent=1 // loop_footer_branch
      %16 = sbr.rel target = $region3
    $region8: #{tpu_custom_call.1} parent=1 // loop_exit
      _
    %1118 = vsyncpa [#allocation5], 1
    %s1119 = scalar_lea.sflag [#allocation5], 1
    %1120 = vsyncpa %s1119, 1
    %1121 = vsyncpa [#allocation8], 1
    %1122 = vsyncpa [#allocation6], 1
    %s1123 = scalar_lea.sflag [#allocation6], 1
    %1124 = vsyncpa %s1123, 1

// kernel: tpu_custom_call.1
$region0: #{tpu_custom_call.1}
  #allocation0 [shape = 'u32[]', space=smem, size = 0x4, offset = 0x4, fixed_abs, tag = 'smem constant byte address 0x4 - core index']
  #allocation1 [shape = 'u32[144,128]{1,0:T(1,128)}', space=vmem, size = 0x12000, scoped, tag = 'internal scratch']
  #allocation2 [shape = 'bf16[64,384]{1,0:T(8,128)(2,1)}', space=vmem, size = 0xc000, scoped, tag = 'scratch operand']
  #allocation3 [shape = 'bf16[64,256]{1,0:T(8,128)(2,1)}', space=vmem, size = 0x8000, scoped, tag = 'scratch operand']
  %s0 = inlined_call_operand.hbm [shape: f32[2,64,128], index: 0, kind: input, shape index: {}]
  %s1 = inlined_call_operand.hbm [shape: bf16[128,384], index: 1, kind: input, shape index: {}]
  %s2 = inlined_call_operand.vmem [shape: f32[1,384], index: 2, kind: input, shape index: {}]
  %s3 = inlined_call_operand.hbm [shape: bf16[64,128], index: 3, kind: input, shape index: {}]
  %s4 = inlined_call_operand.hbm [shape: f32[2,64,128], index: 4, kind: output, shape index: {}]
  %s5 = sld [smem:[#allocation0]]
  $region61: #{tpu_custom_call.1} parent=0
    _
  %s7 = ssub.s32 1, %s5
  %s8 = scalar_select 0, %s7, %s5
  $region1: #{tpu_custom_call.1} parent=0
    #allocation4 [shape = 'u8[65536]{0}', space=vmem, size = 0x10000, scoped, tag = 'input window, operand 0']
    #allocation5 [shape = 's32[2]{0}', space=sflag, size = 0x8, scoped, tag = 'scoped memory for tpu_custom_call.1']
    #allocation6 [shape = 's32[2]{0}', space=sflag, size = 0x8, scoped, tag = 'scoped memory for tpu_custom_call.1']
    #allocation7 [shape = 'u8[98304]{0}', space=vmem, size = 0x18000, scoped, tag = 'input window, operand 1, single buffered']
    #allocation8 [shape = 's32[1]{0}', space=sflag, size = 0x4, scoped, tag = 'scoped memory for tpu_custom_call.1']
    #allocation9 [shape = 'u8[16384]{0}', space=vmem, size = 0x4000, scoped, tag = 'input window, operand 3, single buffered']
    #allocation10 [shape = 'u8[65536]{0}', space=vmem, size = 0x10000, scoped, tag = 'output window, operand 0']
    %9 = vsyncpa [#allocation5], 0
    %s10 = scalar_lea.sflag [#allocation5], 1
    %11 = vsyncpa %s10, 0
    %12 = vsyncpa [#allocation8], 0
    %13 = vsyncpa [#allocation6], 0
    %s14 = scalar_lea.sflag [#allocation6], 1
    %15 = vsyncpa %s14, 0
    loop: start=0, step=1, limit=4
    $region2: #{tpu_custom_call.1} parent=1 // loop_pre_header
      _
    $region3: #{tpu_custom_call.1} parent=1 // loop_header
      %s17 = sphi 0, %s21
      %p18 = scmp.ge.s32.totalorder %s17, 4
      %s27 = sphi 0, %s29
      %s30 = sphi 0, %s27
      %s31 = sphi 0, %s30
      %s47 = sphi 0, %s31
      %s51 = sphi 0, %s51
      %s53 = sphi 0, %s51
      %s54 = sphi 0, %s53
      %s68 = sphi 0, %s54
      %s72 = sphi 0, %s72
      %s74 = sphi 0, %s72
      %s75 = sphi 0, %s74
      %s89 = sphi 0, %s75
      %s93 = sphi 0, %s93
      %s95 = sphi 0, %s93
      %s96 = sphi 0, %s95
      %s110 = sphi 0, %s96
      %s116 = sphi 0, %s118
      %s119 = sphi 0, %s116
      %s120 = sphi 0, %s119
      %s136 = sphi 0, %s120
    $region4: #{tpu_custom_call.1} parent=1 // loop_header_branch
      %20 = sbr.rel (%p18) target = $region8
    $region5: #{tpu_custom_call.1} parent=1 // loop_body
      %s22 = ssub.s32 %s17, 1
      %s23 = ssub.s32 %s17, 2
      %s24 = sadd.s32 %s17, 1
      %s25 = ssub.s32 %s17, %s24
      %p26 = scmp.eq.s32.totalorder %s25, 0
      %s28 = sadd.s32 %s27, 1
      %s29 = scalar_select %p26, %s27, %s28
      %p32 = pneg %p26
      %p33 = scmp.eq.s32.totalorder %s17, 1
      %p34 = por %p32, %p33
      %p35 = scmp.ne.s32.totalorder %s27, %s30
      %p36 = scmp.eq.s32.totalorder %s17, 0
      %p37 = por %p35, %p36
      %p38 = scmp.ne.s32.totalorder %s27, %s30
      %p39 = scmp.eq.s32.totalorder %s22, 1
      %p40 = por %p38, %p39
      %p41 = scmp.ne.s32.totalorder %s30, %s31
      %p42 = scmp.eq.s32.totalorder %s22, 0
      %p43 = por %p41, %p42
      %p44 = scmp.ne.s32.totalorder %s30, %s31
      %p45 = scmp.eq.s32.totalorder %s23, 1
      %p46 = por %p44, %p45
      %p48 = scmp.ne.s32.totalorder %s31, %s47
      %p49 = scmp.eq.s32.totalorder %s23, 0
      %p50 = por %p48, %p49
      %s52 = sadd.s32 %s51, 1
      %p55 = scmp.eq.s32.totalorder %s17, 1
      %p56 = scmp.ne.s32.totalorder %s51, %s53
      %p57 = scmp.eq.s32.totalorder %s17, 0
      %p58 = por %p56, %p57
      %p59 = scmp.ne.s32.totalorder %s51, %s53
      %p60 = scmp.eq.s32.totalorder %s22, 1
      %p61 = por %p59, %p60
      %p62 = scmp.ne.s32.totalorder %s53, %s54
      %p63 = scmp.eq.s32.totalorder %s22, 0
      %p64 = por %p62, %p63
      %p65 = scmp.ne.s32.totalorder %s53, %s54
      %p66 = scmp.eq.s32.totalorder %s23, 1
      %p67 = por %p65, %p66
      %p69 = scmp.ne.s32.totalorder %s54, %s68
      %p70 = scmp.eq.s32.totalorder %s23, 0
      %p71 = por %p69, %p70
      %s73 = sadd.s32 %s72, 1
      %p76 = scmp.eq.s32.totalorder %s17, 1
      %p77 = scmp.ne.s32.totalorder %s72, %s74
      %p78 = scmp.eq.s32.totalorder %s17, 0
      %p79 = por %p77, %p78
      %p80 = scmp.ne.s32.totalorder %s72, %s74
      %p81 = scmp.eq.s32.totalorder %s22, 1
      %p82 = por %p80, %p81
      %p83 = scmp.ne.s32.totalorder %s74, %s75
      %p84 = scmp.eq.s32.totalorder %s22, 0
      %p85 = por %p83, %p84
      %p86 = scmp.ne.s32.totalorder %s74, %s75
      %p87 = scmp.eq.s32.totalorder %s23, 1
      %p88 = por %p86, %p87
      %p90 = scmp.ne.s32.totalorder %s75, %s89
      %p91 = scmp.eq.s32.totalorder %s23, 0
      %p92 = por %p90, %p91
      %s94 = sadd.s32 %s93, 1
      %p97 = scmp.eq.s32.totalorder %s17, 1
      %p98 = scmp.ne.s32.totalorder %s93, %s95
      %p99 = scmp.eq.s32.totalorder %s17, 0
      %p100 = por %p98, %p99
      %p101 = scmp.ne.s32.totalorder %s93, %s95
      %p102 = scmp.eq.s32.totalorder %s22, 1
      %p103 = por %p101, %p102
      %p104 = scmp.ne.s32.totalorder %s95, %s96
      %p105 = scmp.eq.s32.totalorder %s22, 0
      %p106 = por %p104, %p105
      %p107 = scmp.ne.s32.totalorder %s95, %s96
      %p108 = scmp.eq.s32.totalorder %s23, 1
      %p109 = por %p107, %p108
      %p111 = scmp.ne.s32.totalorder %s96, %s110
      %p112 = scmp.eq.s32.totalorder %s23, 0
      %p113 = por %p111, %p112
      %s114 = ssub.s32 %s17, %s24
      %p115 = scmp.eq.s32.totalorder %s114, 0
      %s117 = sadd.s32 %s116, 1
      %s118 = scalar_select %p115, %s116, %s117
      %p121 = pneg %p115
      %p122 = scmp.eq.s32.totalorder %s17, 1
      %p123 = por %p121, %p122
      %p124 = scmp.ne.s32.totalorder %s116, %s119
      %p125 = scmp.eq.s32.totalorder %s17, 0
      %p126 = por %p124, %p125
      %p127 = scmp.ne.s32.totalorder %s116, %s119
      %p128 = scmp.eq.s32.totalorder %s22, 1
      %p129 = por %p127, %p128
      %p130 = scmp.ne.s32.totalorder %s119, %s120
      %p131 = scmp.eq.s32.totalorder %s22, 0
      %p132 = por %p130, %p131
      %p133 = scmp.ne.s32.totalorder %s119, %s120
      %p134 = scmp.eq.s32.totalorder %s23, 1
      %p135 = por %p133, %p134
      %p137 = scmp.ne.s32.totalorder %s120, %s136
      %p138 = scmp.eq.s32.totalorder %s23, 0
      %p139 = por %p137, %p138
      %p140 = scmp.le.s32.totalorder 1, %s17
      %p141 = scmp.lt.s32.totalorder %s17, 3
      %p142 = pnand %p140, %p141
      %p143 = pneg %p142
      // Predicated region
      $region9: #{tpu_custom_call.1} parent=5 // pred_check
        _
      $region10: #{tpu_custom_call.1} parent=5 // pred_check_branch
        %145 = sbr.rel (%p142) target = $region12
      $region11: #{tpu_custom_call.1} parent=5 // pred_region
        %s146 = ssub.s32 %s17, 1
        // Predicated region
        $region13: #{tpu_custom_call.1} parent=11 // pred_check
          %p147 = pneg %p64
        $region14: #{tpu_custom_call.1} parent=11 // pred_check_branch
          %149 = sbr.rel (%p147) target = $region16
        $region15: #{tpu_custom_call.1} parent=11 // pred_region
          %s151 = ssub.s32 3072, 3072
          %152 = vsyncadd [#allocation8], %s151
          %s153 = sshll.u32 [#allocation7], 4
          %s154 = int_to_ptr.vmem [resolvable:$true] %s153
          %159 = dma.hbm_to_vmem [thread:$0]  %s1, 3072, %s154, [#allocation8], 192, 192, 12
        $region16: #{tpu_custom_call.1} parent=11 // pred_fallthru
          _
        // Predicated region
        $region17: #{tpu_custom_call.1} parent=11 // pred_check
          %p160 = pneg %p85
        $region18: #{tpu_custom_call.1} parent=11 // pred_check_branch
          %162 = sbr.rel (%p160) target = $region20
        $region19: #{tpu_custom_call.1} parent=11 // pred_region
          _
        $region20: #{tpu_custom_call.1} parent=11 // pred_fallthru
          _
        // Predicated region
        $region21: #{tpu_custom_call.1} parent=11 // pred_check
          %p163 = pneg %p106
        $region22: #{tpu_custom_call.1} parent=11 // pred_check_branch
          %165 = sbr.rel (%p163) target = $region24
        $region23: #{tpu_custom_call.1} parent=11 // pred_region
          %s167 = ssub.s32 512, 512
          %168 = vsyncadd [#allocation8], %s167
          %s169 = sshll.u32 [#allocation9], 4
          %s170 = int_to_ptr.vmem [resolvable:$true] %s169
          %175 = dma.hbm_to_vmem [thread:$0]  %s3, 512, %s170, [#allocation8], 64, 64, 4
        $region24: #{tpu_custom_call.1} parent=11 // pred_fallthru
          _
      $region12: #{tpu_custom_call.1} parent=5 // pred_fallthru
        _
      %p176 = scmp.lt.s32.totalorder %s17, 2
      // Predicated region
      $region25: #{tpu_custom_call.1} parent=5 // pred_check
        %p177 = pneg %p176
      $region26: #{tpu_custom_call.1} parent=5 // pred_check_branch
        %179 = sbr.rel (%p177) target = $region28
      $region27: #{tpu_custom_call.1} parent=5 // pred_region
        // Predicated region
        $region29: #{tpu_custom_call.1} parent=27 // pred_check
          %p180 = pneg %p37
        $region30: #{tpu_custom_call.1} parent=27 // pred_check_branch
          %182 = sbr.rel (%p180) target = $region32
        $region31: #{tpu_custom_call.1} parent=27 // pred_region
          %s183 = sand.u32 %s27, 1
          %s184 = scalar_lea.sflag [#allocation5], %s183
          %s185 = sand.u32 %s27, 1
          %s186 = smul.addr %s185, 64
          %s187 = scalar_lea.vmem [#allocation4], %s186
          %s189 = ssub.s32 1024, 1024
          %190 = vsyncadd %s184, %s189
          %s191 = smul.addr %s17, 8
          %s192 = smul.addr %s191, 128
          %s193 = scalar_lea.hbm %s0, %s192
          %s194 = sshll.u32 %s187, 4
          %s195 = int_to_ptr.vmem [resolvable:$true] %s194
          %200 = dma.hbm_to_vmem [thread:$0]  %s193, 1024, %s195, %s184, 128, 128, 8
        $region32: #{tpu_custom_call.1} parent=27 // pred_fallthru
          _
      $region28: #{tpu_custom_call.1} parent=5 // pred_fallthru
        _
      %p201 = scmp.le.s32.totalorder 1, %s17
      %p202 = scmp.lt.s32.totalorder %s17, 3
      %p203 = pnand %p201, %p202
      %p204 = pneg %p203
      // Predicated region
      $region33: #{tpu_custom_call.1} parent=5 // pred_check
        _
      $region34: #{tpu_custom_call.1} parent=5 // pred_check_branch
        %206 = sbr.rel (%p203) target = $region36
      $region35: #{tpu_custom_call.1} parent=5 // pred_region
        %s207 = ssub.s32 %s17, 1
        %s208 = sand.u32 %s30, 1
        %s209 = scalar_lea.sflag [#allocation5], %s208
        %s210 = sand.u32 %s30, 1
        %s211 = smul.addr %s210, 64
        %s212 = scalar_lea.vmem [#allocation4], %s211
        // Predicated region
        $region37: #{tpu_custom_call.1} parent=35 // pred_check
          %p213 = pneg %p43
        $region38: #{tpu_custom_call.1} parent=35 // pred_check_branch
          %215 = sbr.rel (%p213) target = $region40
        $region39: #{tpu_custom_call.1} parent=35 // pred_region
          %216 = dma.done %s209, 1024
        $region40: #{tpu_custom_call.1} parent=35 // pred_fallthru
          _
        // Predicated region
        $region41: #{tpu_custom_call.1} parent=35 // pred_check
          %p217 = pneg %p64
        $region42: #{tpu_custom_call.1} parent=35 // pred_check_branch
          %219 = sbr.rel (%p217) target = $region44
        $region43: #{tpu_custom_call.1} parent=35 // pred_region
          %220 = dma.done [#allocation8], 3072
        $region44: #{tpu_custom_call.1} parent=35 // pred_fallthru
          _
        // Predicated region
        $region45: #{tpu_custom_call.1} parent=35 // pred_check
          %p221 = pneg %p106
        $region46: #{tpu_custom_call.1} parent=35 // pred_check_branch
          %223 = sbr.rel (%p221) target = $region48
        $region47: #{tpu_custom_call.1} parent=35 // pred_region
          %224 = dma.done [#allocation8], 512
        $region48: #{tpu_custom_call.1} parent=35 // pred_fallthru
          _
        %s225 = sand.u32 %s30, 1
        %s226 = scalar_lea.sflag [#allocation5], %s225
        %s227 = sand.u32 %s30, 1
        %s228 = smul.addr %s227, 64
        %s229 = scalar_lea.vmem [#allocation4], %s228
        %p230 = pneg %p43
        %p231 = pneg %p40
        %p232 = pneg %p64
        %p233 = pneg %p61
        %p234 = pneg %p85
        %p235 = pneg %p82
        %p236 = pneg %p106
        %p237 = pneg %p103
        %p238 = pneg %p132
        %p239 = pneg %p129
        %s240 = sand.u32 %s119, 1
        %s241 = scalar_lea.sflag [#allocation6], %s240
        %s242 = sand.u32 %s119, 1
        %s243 = smul.addr %s242, 64
        %s244 = scalar_lea.vmem [#allocation10], %s243
        %v246 = vld [vmem:[%s212] sm:$0xff]
        %v247 = vld [vmem:[%s212 + $0x8] sm:$0xff]
        %v248 = vld [vmem:[%s212 + $0x10] sm:$0xff]
        %v249 = vld [vmem:[%s212 + $0x18] sm:$0xff]
        %v250 = vld [vmem:[%s212 + $0x20] sm:$0xff]
        %v251 = vld [vmem:[%s212 + $0x28] sm:$0xff]
        %v252 = vld [vmem:[%s212 + $0x30] sm:$0xff]
        %v253 = vld [vmem:[%s212 + $0x38] sm:$0xff]
        %v254 = vpack.c.bf16 %v247, %v246
        %v255 = vpack.c.bf16 %v249, %v248
        %v256 = vpack.c.bf16 %v251, %v250
        %v257 = vpack.c.bf16 %v253, %v252
        %v258 = vld [vmem:[#allocation7] sm:$0xff]
        %v259 = vld [vmem:[#allocation7 + $0x8] sm:$0xf]
        %v260 = vld [vmem:[#allocation7 + $0xc] sm:$0xff]
        %v261 = vld [vmem:[#allocation7 + $0x14] sm:$0xf]
        %v262 = vld [vmem:[#allocation7 + $0x18] sm:$0xff]
        %v263 = vld [vmem:[#allocation7 + $0x20] sm:$0xf]
        %v264 = vld [vmem:[#allocation7 + $0x24] sm:$0xff]
        %v265 = vld [vmem:[#allocation7 + $0x2c] sm:$0xf]
        %v266 = vld [vmem:[#allocation7 + $0x30] sm:$0xff]
        %v267 = vld [vmem:[#allocation7 + $0x38] sm:$0xf]
        %v268 = vld [vmem:[#allocation7 + $0x3c] sm:$0xff]
        %v269 = vld [vmem:[#allocation7 + $0x44] sm:$0xf]
        %v270 = vld [vmem:[#allocation7 + $0x48] sm:$0xff]
        %v271 = vld [vmem:[#allocation7 + $0x50] sm:$0xf]
        %v272 = vld [vmem:[#allocation7 + $0x54] sm:$0xff]
        %v273 = vld [vmem:[#allocation7 + $0x5c] sm:$0xf]
        %v274 = vld [vmem:[#allocation7 + $0x60] sm:$0xff]
        %v275 = vld [vmem:[#allocation7 + $0x68] sm:$0xf]
        %v276 = vld [vmem:[#allocation7 + $0x6c] sm:$0xff]
        %v277 = vld [vmem:[#allocation7 + $0x74] sm:$0xf]
        %v278 = vld [vmem:[#allocation7 + $0x78] sm:$0xff]
        %v279 = vld [vmem:[#allocation7 + $0x80] sm:$0xf]
        %v280 = vld [vmem:[#allocation7 + $0x84] sm:$0xff]
        %v281 = vld [vmem:[#allocation7 + $0x8c] sm:$0xf]
        %v282 = vld [vmem:[#allocation7 + $0x90] sm:$0xff]
        %v283 = vld [vmem:[#allocation7 + $0x98] sm:$0xf]
        %v284 = vld [vmem:[#allocation7 + $0x9c] sm:$0xff]
        %v285 = vld [vmem:[#allocation7 + $0xa4] sm:$0xf]
        %v286 = vld [vmem:[#allocation7 + $0xa8] sm:$0xff]
        %v287 = vld [vmem:[#allocation7 + $0xb0] sm:$0xf]
        %v288 = vld [vmem:[#allocation7 + $0xb4] sm:$0xff]
        %v289 = vld [vmem:[#allocation7 + $0xbc] sm:$0xf]
        %v290 = vld [vmem:[%s2] sm:$0x7]
        %v292 = vlaneseq
        %v293 = vshrl.u32 %v292, 7
        %v294 = vsub.s32 0, %v293
        %v295 = vrot.slane %v290, %v294
        %v296 = vlaneseq
        %v297 = vshrl.u32 %v296, 7
        %v298 = vsub.s32 1, %v297
        %v299 = vrot.slane %v290, %v298
        %v300 = vlaneseq
        %v301 = vshrl.u32 %v300, 7
        %v302 = vsub.s32 2, %v301
        %v303 = vrot.slane %v290, %v302
        %v339 = vunpack.c.l.b16 %v258
        %v340 = vunpack.c.h.b16 %v258
        %v341 = vunpack.c.l.b16 %v259
        %v342 = vunpack.c.l.b16 %v260
        %v343 = vunpack.c.h.b16 %v260
        %v344 = vunpack.c.l.b16 %v261
        %v345 = vunpack.c.l.b16 %v262
        %v346 = vunpack.c.h.b16 %v262
        %v347 = vunpack.c.l.b16 %v263
        %v348 = vunpack.c.l.b16 %v264
        %v349 = vunpack.c.h.b16 %v264
        %v350 = vunpack.c.l.b16 %v265
        %v351 = vunpack.c.l.b16 %v266
        %v352 = vunpack.c.h.b16 %v266
        %v353 = vunpack.c.l.b16 %v267
        %v354 = vunpack.c.l.b16 %v268
        %v355 = vunpack.c.h.b16 %v268
        %v356 = vunpack.c.l.b16 %v269
        %v357 = vunpack.c.l.b16 %v270
        %v358 = vunpack.c.h.b16 %v270
        %v359 = vunpack.c.l.b16 %v271
        %v360 = vunpack.c.l.b16 %v272
        %v361 = vunpack.c.h.b16 %v272
        %v362 = vunpack.c.l.b16 %v273
        %v363 = vunpack.c.l.b16 %v274
        %v364 = vunpack.c.h.b16 %v274
        %v365 = vunpack.c.l.b16 %v275
        %v366 = vunpack.c.l.b16 %v276
        %v367 = vunpack.c.h.b16 %v276
        %v368 = vunpack.c.l.b16 %v277
        %v369 = vunpack.c.l.b16 %v278
        %v370 = vunpack.c.h.b16 %v278
        %v371 = vunpack.c.l.b16 %v279
        %v372 = vunpack.c.l.b16 %v280
        %v373 = vunpack.c.h.b16 %v280
        %v374 = vunpack.c.l.b16 %v281
        %v375 = vunpack.c.l.b16 %v282
        %v376 = vunpack.c.h.b16 %v282
        %v377 = vunpack.c.l.b16 %v283
        %v378 = vunpack.c.l.b16 %v284
        %v379 = vunpack.c.h.b16 %v284
        %v380 = vunpack.c.l.b16 %v285
        %v381 = vunpack.c.l.b16 %v286
        %v382 = vunpack.c.h.b16 %v286
        %v383 = vunpack.c.l.b16 %v287
        %v384 = vunpack.c.l.b16 %v288
        %v385 = vunpack.c.h.b16 %v288
        %v386 = vunpack.c.l.b16 %v289
        %v387 = vpack.c.b16 %v342, %v339
        %v388 = vpack.c.b16 %v343, %v340
        %v389 = vpack.c.b16 %v344, %v341
        %v390 = vpack.c.b16 %v348, %v345
        %v391 = vpack.c.b16 %v349, %v346
        %v392 = vpack.c.b16 %v350, %v347
        %v393 = vpack.c.b16 %v354, %v351
        %v394 = vpack.c.b16 %v355, %v352
        %v395 = vpack.c.b16 %v356, %v353
        %v396 = vpack.c.b16 %v360, %v357
        %v397 = vpack.c.b16 %v361, %v358
        %v398 = vpack.c.b16 %v362, %v359
        %v399 = vpack.c.b16 %v366, %v363
        %v400 = vpack.c.b16 %v367, %v364
        %v401 = vpack.c.b16 %v368, %v365
        %v402 = vpack.c.b16 %v372, %v369
        %v403 = vpack.c.b16 %v373, %v370
        %v404 = vpack.c.b16 %v374, %v371
        %v405 = vpack.c.b16 %v378, %v375
        %v406 = vpack.c.b16 %v379, %v376
        %v407 = vpack.c.b16 %v380, %v377
        %v408 = vpack.c.b16 %v384, %v381
        %v409 = vpack.c.b16 %v385, %v382
        %v410 = vpack.c.b16 %v386, %v383
        %435 = vmatprep.subr.bf16.mxu0 %v409
        %436 = vmatpush1.bf16.msra.mxu0 %v408
        %437 = vmatprep.subr.bf16.mxu0 %v406
        %438 = vmatpush1.bf16.msra.mxu0 %v405
        %439 = vmatprep.subr.bf16.mxu0 %v403
        %440 = vmatpush1.bf16.msra.mxu0 %v402
        %441 = vmatprep.subr.bf16.mxu0 %v400
        %442 = vmatpush1.bf16.msra.mxu0 %v399
        %443 = vmatprep.subr.bf16.mxu0 %v397
        %444 = vmatpush1.bf16.msra.mxu0 %v396
        %445 = vmatprep.subr.bf16.mxu0 %v394
        %446 = vmatpush1.bf16.msra.mxu0 %v393
        %447 = vmatprep.subr.bf16.mxu0 %v391
        %448 = vmatpush1.bf16.msra.mxu0 %v390
        %449 = vmatprep.subr.bf16.mxu0 %v388
        %450 = vmatpush1.bf16.msra.mxu0 %v387
        %451 = vmatprep.subr.bf16.mxu0 0
        %452 = vmatpush2.bf16.msra.mxu0 0
        %453 = vmatprep.subr.bf16.mxu0 0
        %454 = vmatpush2.bf16.msra.mxu0 0
        %455 = vmatprep.subr.bf16.mxu0 0
        %456 = vmatpush2.bf16.msra.mxu0 0
        %457 = vmatprep.subr.bf16.mxu0 0
        %458 = vmatpush2.bf16.msra.mxu0 0
        %459 = vmatprep.subr.bf16.mxu0 0
        %460 = vmatpush2.bf16.msra.mxu0 0
        %461 = vmatprep.subr.bf16.mxu0 0
        %462 = vmatpush2.bf16.msra.mxu0 0
        %463 = vmatprep.subr.bf16.mxu0 0
        %464 = vmatpush2.bf16.msra.mxu0 0
        %465 = vmatprep.subr.bf16.mxu0 0
        %466 = vmatpush2.bf16.msra.mxu0 0
        %467 = vmatprep.mubr.bf16.mxu0 0
        %468 = vmatmul.mubr.bf16.gmra.mxu0 %v254
        %v469 = vpop.f32.mrf.mxu0
        %v470 = vadd.f32 %v295, %v469
        %v471 = vpop.f32.mrf.mxu0
        %v472 = vadd.f32 %v299, %v471
        %v473 = vpop.f32.mrf.mxu0
        %v474 = vadd.f32 %v295, %v473
        %v475 = vpop.f32.mrf.mxu0
        %v476 = vadd.f32 %v299, %v475
        %477 = vmatprep.mubr.bf16.mxu0 0
        %478 = vmatmul.mubr.bf16.gmra.mxu0 %v255
        %v479 = vpop.f32.mrf.mxu0
        %v480 = vadd.f32 %v295, %v479
        %v481 = vpop.f32.mrf.mxu0
        %v482 = vadd.f32 %v299, %v481
        %v483 = vpop.f32.mrf.mxu0
        %v484 = vadd.f32 %v295, %v483
        %v485 = vpop.f32.mrf.mxu0
        %v486 = vadd.f32 %v299, %v485
        %487 = vmatprep.mubr.bf16.mxu0 0
        %488 = vmatmul.mubr.bf16.gmra.mxu0 %v256
        %v489 = vpop.f32.mrf.mxu0
        %v490 = vadd.f32 %v295, %v489
        %v491 = vpop.f32.mrf.mxu0
        %v492 = vadd.f32 %v299, %v491
        %v493 = vpop.f32.mrf.mxu0
        %v494 = vadd.f32 %v295, %v493
        %v495 = vpop.f32.mrf.mxu0
        %v496 = vadd.f32 %v299, %v495
        %497 = vmatprep.mubr.bf16.mxu0 0
        %498 = vmatmul.mubr.bf16.gmra.mxu0 %v257
        %v499 = vpop.f32.mrf.mxu0
        %v500 = vadd.f32 %v295, %v499
        %v501 = vpop.f32.mrf.mxu0
        %v502 = vadd.f32 %v299, %v501
        %v503 = vpop.f32.mrf.mxu0
        %v504 = vadd.f32 %v295, %v503
        %v505 = vpop.f32.mrf.mxu0
        %v506 = vadd.f32 %v299, %v505
        %507 = vdwg.mxu0
        %508 = vmatprep.subr.bf16.mxu0 0
        %509 = vmatpush1.bf16.msra.mxu0 %v410
        %510 = vmatprep.subr.bf16.mxu0 0
        %511 = vmatpush1.bf16.msra.mxu0 %v407
        %512 = vmatprep.subr.bf16.mxu0 0
        %513 = vmatpush1.bf16.msra.mxu0 %v404
        %514 = vmatprep.subr.bf16.mxu0 0
        %515 = vmatpush1.bf16.msra.mxu0 %v401
        %516 = vmatprep.subr.bf16.mxu0 0
        %517 = vmatpush1.bf16.msra.mxu0 %v398
        %518 = vmatprep.subr.bf16.mxu0 0
        %519 = vmatpush1.bf16.msra.mxu0 %v395
        %520 = vmatprep.subr.bf16.mxu0 0
        %521 = vmatpush1.bf16.msra.mxu0 %v392
        %522 = vmatprep.subr.bf16.mxu0 0
        %523 = vmatpush1.bf16.msra.mxu0 %v389
        %524 = vmatprep.subr.bf16.mxu0 0
        %525 = vmatpush2.bf16.msra.mxu0 0
        %526 = vmatprep.subr.bf16.mxu0 0
        %527 = vmatpush2.bf16.msra.mxu0 0
        %528 = vmatprep.subr.bf16.mxu0 0
        %529 = vmatpush2.bf16.msra.mxu0 0
        %530 = vmatprep.subr.bf16.mxu0 0
        %531 = vmatpush2.bf16.msra.mxu0 0
        %532 = vmatprep.subr.bf16.mxu0 0
        %533 = vmatpush2.bf16.msra.mxu0 0
        %534 = vmatprep.subr.bf16.mxu0 0
        %535 = vmatpush2.bf16.msra.mxu0 0
        %536 = vmatprep.subr.bf16.mxu0 0
        %537 = vmatpush2.bf16.msra.mxu0 0
        %538 = vmatprep.subr.bf16.mxu0 0
        %539 = vmatpush2.bf16.msra.mxu0 0
        %540 = vmatprep.mubr.bf16.mxu0 0
        %541 = vmatmul.mubr.bf16.gmra.mxu0 %v254
        %v542 = vpop.f32.mrf.mxu0
        %v543 = vadd.f32 %v303, %v542
        %v544 = vpop.f32.mrf.mxu0
        %v545 = vpop.f32.mrf.mxu0
        %v546 = vadd.f32 %v303, %v545
        %v547 = vpop.f32.mrf.mxu0
        %548 = vmatprep.mubr.bf16.mxu0 0
        %549 = vmatmul.mubr.bf16.gmra.mxu0 %v255
        %v550 = vpop.f32.mrf.mxu0
        %v551 = vadd.f32 %v303, %v550
        %v552 = vpop.f32.mrf.mxu0
        %v553 = vpop.f32.mrf.mxu0
        %v554 = vadd.f32 %v303, %v553
        %v555 = vpop.f32.mrf.mxu0
        %556 = vmatprep.mubr.bf16.mxu0 0
        %557 = vmatmul.mubr.bf16.gmra.mxu0 %v256
        %v558 = vpop.f32.mrf.mxu0
        %v559 = vadd.f32 %v303, %v558
        %v560 = vpop.f32.mrf.mxu0
        %v561 = vpop.f32.mrf.mxu0
        %v562 = vadd.f32 %v303, %v561
        %v563 = vpop.f32.mrf.mxu0
        %564 = vmatprep.mubr.bf16.mxu0 0
        %565 = vmatmul.mubr.bf16.gmra.mxu0 %v257
        %v566 = vpop.f32.mrf.mxu0
        %v567 = vadd.f32 %v303, %v566
        %v568 = vpop.f32.mrf.mxu0
        %v569 = vpop.f32.mrf.mxu0
        %v570 = vadd.f32 %v303, %v569
        %v571 = vpop.f32.mrf.mxu0
        %572 = vdwg.mxu0
        %v573 = vpack.c.bf16 %v474, %v470
        %v574 = vpack.c.bf16 %v476, %v472
        %v575 = vpack.c.bf16 %v546, %v543
        %v576 = vpack.c.bf16 %v484, %v480
        %v577 = vpack.c.bf16 %v486, %v482
        %v578 = vpack.c.bf16 %v554, %v551
        %v579 = vpack.c.bf16 %v494, %v490
        %v580 = vpack.c.bf16 %v496, %v492
        %v581 = vpack.c.bf16 %v562, %v559
        %v582 = vpack.c.bf16 %v504, %v500
        %v583 = vpack.c.bf16 %v506, %v502
        %v584 = vpack.c.bf16 %v570, %v567
        %v597 = vunpack.c.l.b16 %v573
        %v598 = vunpack.c.l.b16 %v574
        %v599 = vunpack.c.l.b16 %v575
        %v600 = vunpack.c.h.b16 %v573
        %v601 = vunpack.c.h.b16 %v574
        %v602 = vunpack.c.h.b16 %v575
        %v603 = vunpack.c.l.b16 %v576
        %v604 = vunpack.c.l.b16 %v577
        %v605 = vunpack.c.l.b16 %v578
        %v606 = vunpack.c.h.b16 %v576
        %v607 = vunpack.c.h.b16 %v577
        %v608 = vunpack.c.h.b16 %v578
        %v609 = vunpack.c.l.b16 %v579
        %v610 = vunpack.c.l.b16 %v580
        %v611 = vunpack.c.l.b16 %v581
        %v612 = vunpack.c.h.b16 %v579
        %v613 = vunpack.c.h.b16 %v580
        %v614 = vunpack.c.h.b16 %v581
        %v615 = vunpack.c.l.b16 %v582
        %v616 = vunpack.c.l.b16 %v583
        %v617 = vunpack.c.l.b16 %v584
        %v618 = vunpack.c.h.b16 %v582
        %v619 = vunpack.c.h.b16 %v583
        %v620 = vunpack.c.h.b16 %v584
        %v621 = vpack.c.b16 %v598, %v597
        %v622 = vpack.c.b16 %v599, %v599
        %v623 = vpack.c.b16 %v601, %v600
        %v624 = vpack.c.b16 %v602, %v602
        %v625 = vpack.c.b16 %v604, %v603
        %v626 = vpack.c.b16 %v605, %v605
        %v627 = vpack.c.b16 %v607, %v606
        %v628 = vpack.c.b16 %v608, %v608
        %v629 = vpack.c.b16 %v610, %v609
        %v630 = vpack.c.b16 %v611, %v611
        %v631 = vpack.c.b16 %v613, %v612
        %v632 = vpack.c.b16 %v614, %v614
        %v633 = vpack.c.b16 %v616, %v615
        %v634 = vpack.c.b16 %v617, %v617
        %v635 = vpack.c.b16 %v619, %v618
        %v636 = vpack.c.b16 %v620, %v620
        %653 = vst [vmem:[#allocation2] sm:$0xff] %v621
        %654 = vst [vmem:[#allocation2 + $0x8] sm:$0xf] %v622
        %655 = vst [vmem:[#allocation2 + $0xc] sm:$0xff] %v623
        %656 = vst [vmem:[#allocation2 + $0x14] sm:$0xf] %v624
        %657 = vst [vmem:[#allocation2 + $0x18] sm:$0xff] %v625
        %658 = vst [vmem:[#allocation2 + $0x20] sm:$0xf] %v626
        %659 = vst [vmem:[#allocation2 + $0x24] sm:$0xff] %v627
        %660 = vst [vmem:[#allocation2 + $0x2c] sm:$0xf] %v628
        %661 = vst [vmem:[#allocation2 + $0x30] sm:$0xff] %v629
        %662 = vst [vmem:[#allocation2 + $0x38] sm:$0xf] %v630
        %663 = vst [vmem:[#allocation2 + $0x3c] sm:$0xff] %v631
        %664 = vst [vmem:[#allocation2 + $0x44] sm:$0xf] %v632
        %665 = vst [vmem:[#allocation2 + $0x48] sm:$0xff] %v633
        %666 = vst [vmem:[#allocation2 + $0x50] sm:$0xf] %v634
        %667 = vst [vmem:[#allocation2 + $0x54] sm:$0xff] %v635
        %668 = vst [vmem:[#allocation2 + $0x5c] sm:$0xf] %v636
        %v669 = vld [vmem:[#allocation9] sm:$0xf]
        %v670 = vld [vmem:[#allocation9 + $0x4] sm:$0xf]
        %v671 = vld [vmem:[#allocation9 + $0x8] sm:$0xf]
        %v672 = vld [vmem:[#allocation9 + $0xc] sm:$0xf]
        %v673 = vld [vmem:[#allocation9 + $0x10] sm:$0xf]
        %v674 = vld [vmem:[#allocation9 + $0x14] sm:$0xf]
        %v675 = vld [vmem:[#allocation9 + $0x18] sm:$0xf]
        %v676 = vld [vmem:[#allocation9 + $0x1c] sm:$0xf]
        %677 = vst [vmem:[#allocation3 + $0x4] sm:$0xf] %v669
        %678 = vst [vmem:[#allocation3 + $0xc] sm:$0xf] %v670
        %679 = vst [vmem:[#allocation3 + $0x14] sm:$0xf] %v671
        %680 = vst [vmem:[#allocation3 + $0x1c] sm:$0xf] %v672
        %681 = vst [vmem:[#allocation3 + $0x24] sm:$0xf] %v673
        %682 = vst [vmem:[#allocation3 + $0x2c] sm:$0xf] %v674
        %683 = vst [vmem:[#allocation3 + $0x34] sm:$0xf] %v675
        %684 = vst [vmem:[#allocation3 + $0x3c] sm:$0xf] %v676
        %s685 = smul.u32 0, 3
        %s686 = smul.addr %s685, 4
        %s687 = scalar_lea.vmem [#allocation2], %s686
        %v688 = vld [vmem:[%s687] sm:$0xff]
        %v689 = vld [vmem:[%s687 + $0x8] sm:$0xf]
        %v690 = vld [vmem:[%s687 + $0xc] sm:$0xff]
        %v691 = vld [vmem:[%s687 + $0x14] sm:$0xf]
        %v692 = vld [vmem:[%s687 + $0x18] sm:$0xff]
        %v693 = vld [vmem:[%s687 + $0x20] sm:$0xf]
        %v694 = vld [vmem:[%s687 + $0x24] sm:$0xff]
        %v695 = vld [vmem:[%s687 + $0x2c] sm:$0xf]
        %v696 = vld [vmem:[%s687 + $0x30] sm:$0xff]
        %v697 = vld [vmem:[%s687 + $0x38] sm:$0xf]
        %v698 = vld [vmem:[%s687 + $0x3c] sm:$0xff]
        %v699 = vld [vmem:[%s687 + $0x44] sm:$0xf]
        %v700 = vld [vmem:[%s687 + $0x48] sm:$0xff]
        %v701 = vld [vmem:[%s687 + $0x50] sm:$0xf]
        %v702 = vld [vmem:[%s687 + $0x54] sm:$0xff]
        %v703 = vld [vmem:[%s687 + $0x5c] sm:$0xf]
        %v712 = vrot.slane %v688, 4
        %v713 = vrot.slane %v690, 4
        %v714 = vrot.slane %v692, 4
        %v715 = vrot.slane %v694, 4
        %v716 = vrot.slane %v696, 4
        %v717 = vrot.slane %v698, 4
        %v718 = vrot.slane %v700, 4
        %v719 = vrot.slane %v702, 4
        %728 = vst [vmem:[#allocation3] sm:$0xf] %v712
        %729 = vst [vmem:[#allocation3 + $0x8] sm:$0xf] %v713
        %730 = vst [vmem:[#allocation3 + $0x10] sm:$0xf] %v714
        %731 = vst [vmem:[#allocation3 + $0x18] sm:$0xf] %v715
        %732 = vst [vmem:[#allocation3 + $0x20] sm:$0xf] %v716
        %733 = vst [vmem:[#allocation3 + $0x28] sm:$0xf] %v717
        %734 = vst [vmem:[#allocation3 + $0x30] sm:$0xf] %v718
        %735 = vst [vmem:[#allocation3 + $0x38] sm:$0xf] %v719
        %v736 = vld [vmem:[#allocation3] sm:$0xff]
        %v737 = vld [vmem:[#allocation3 + $0x8] sm:$0xff]
        %v738 = vld [vmem:[#allocation3 + $0x10] sm:$0xff]
        %v739 = vld [vmem:[#allocation3 + $0x18] sm:$0xff]
        %v740 = vld [vmem:[#allocation3 + $0x20] sm:$0xff]
        %v741 = vld [vmem:[#allocation3 + $0x28] sm:$0xff]
        %v742 = vld [vmem:[#allocation3 + $0x30] sm:$0xff]
        %v743 = vld [vmem:[#allocation3 + $0x38] sm:$0xff]
        %v752 = vunpack.c.l.b16 %v736
        %v753 = vunpack.c.h.b16 %v736
        %v754 = vunpack.c.l.b16 %v737
        %v755 = vunpack.c.h.b16 %v737
        %v756 = vunpack.c.l.b16 %v738
        %v757 = vunpack.c.h.b16 %v738
        %v758 = vunpack.c.l.b16 %v739
        %v759 = vunpack.c.h.b16 %v739
        %v760 = vunpack.c.l.b16 %v740
        %v761 = vunpack.c.h.b16 %v740
        %v762 = vunpack.c.l.b16 %v741
        %v763 = vunpack.c.h.b16 %v741
        %v764 = vunpack.c.l.b16 %v742
        %v765 = vunpack.c.h.b16 %v742
        %v766 = vunpack.c.l.b16 %v743
        %v767 = vunpack.c.h.b16 %v743
        %v768 = vpack.c.b16 %v754, %v752
        %v769 = vpack.c.b16 %v755, %v753
        %v770 = vpack.c.b16 %v758, %v756
        %v771 = vpack.c.b16 %v759, %v757
        %v772 = vpack.c.b16 %v762, %v760
        %v773 = vpack.c.b16 %v763, %v761
        %v774 = vpack.c.b16 %v766, %v764
        %v775 = vpack.c.b16 %v767, %v765
        %v784 = vunpack.c.l.b16 %v688
        %v785 = vunpack.c.h.b16 %v688
        %v786 = vunpack.c.l.b16 %v690
        %v787 = vunpack.c.h.b16 %v690
        %v788 = vunpack.c.l.b16 %v692
        %v789 = vunpack.c.h.b16 %v692
        %v790 = vunpack.c.l.b16 %v694
        %v791 = vunpack.c.h.b16 %v694
        %v792 = vunpack.c.l.b16 %v696
        %v793 = vunpack.c.h.b16 %v696
        %v794 = vunpack.c.l.b16 %v698
        %v795 = vunpack.c.h.b16 %v698
        %v796 = vunpack.c.l.b16 %v700
        %v797 = vunpack.c.h.b16 %v700
        %v798 = vunpack.c.l.b16 %v702
        %v799 = vunpack.c.h.b16 %v702
        %v800 = vpack.c.b16 %v786, %v784
        %v801 = vpack.c.b16 %v787, %v785
        %v802 = vpack.c.b16 %v790, %v788
        %v803 = vpack.c.b16 %v791, %v789
        %v804 = vpack.c.b16 %v794, %v792
        %v805 = vpack.c.b16 %v795, %v793
        %v806 = vpack.c.b16 %v798, %v796
        %v807 = vpack.c.b16 %v799, %v797
        %816 = vmatprep.subr.bf16.mxu0 0
        %817 = vmatpush1.bf16.xpose.msra.mxu0 0
        %818 = vmatprep.subr.bf16.mxu0 0
        %819 = vmatpush1.bf16.xpose.msra.mxu0 0
        %820 = vmatprep.subr.bf16.mxu0 0
        %821 = vmatpush1.bf16.xpose.msra.mxu0 0
        %822 = vmatprep.subr.bf16.mxu0 0
        %823 = vmatpush1.bf16.xpose.msra.mxu0 0
        %824 = vmatprep.subr.bf16.mxu0 %v807
        %825 = vmatpush1.bf16.xpose.msra.mxu0 %v806
        %826 = vmatprep.subr.bf16.mxu0 %v805
        %827 = vmatpush1.bf16.xpose.msra.mxu0 %v804
        %828 = vmatprep.subr.bf16.mxu0 %v803
        %829 = vmatpush1.bf16.xpose.msra.mxu0 %v802
        %830 = vmatprep.subr.bf16.mxu0 %v801
        %831 = vmatpush1.bf16.xpose.msra.mxu0 %v800
        %832 = vmatprep.subr.bf16.mxu0 0
        %833 = vmatpush2.bf16.xpose.msra.mxu0 0
        %834 = vmatprep.subr.bf16.mxu0 0
        %835 = vmatpush2.bf16.xpose.msra.mxu0 0
        %836 = vmatprep.subr.bf16.mxu0 0
        %837 = vmatpush2.bf16.xpose.msra.mxu0 0
        %838 = vmatprep.subr.bf16.mxu0 0
        %839 = vmatpush2.bf16.xpose.msra.mxu0 0
        %840 = vmatprep.subr.bf16.mxu0 0
        %841 = vmatpush2.bf16.xpose.msra.mxu0 0
        %842 = vmatprep.subr.bf16.mxu0 0
        %843 = vmatpush2.bf16.xpose.msra.mxu0 0
        %844 = vmatprep.subr.bf16.mxu0 0
        %845 = vmatpush2.bf16.xpose.msra.mxu0 0
        %846 = vmatprep.subr.bf16.mxu0 0
        %847 = vmatpush2.bf16.xpose.msra.mxu0 0
        %848 = vmatprep.mubr.bf16.mxu0 %v769
        %849 = vmatmul.mubr.bf16.gmra.mxu0 %v768
        %v850 = vpop.f32.mrf.mxu0
        %v851 = vadd.f32 0.0, %v850
        %v852 = vpop.f32.mrf.mxu0
        %v853 = vpop.f32.mrf.mxu0
        %v854 = vadd.f32 0.0, %v853
        %v855 = vpop.f32.mrf.mxu0
        %856 = vmatprep.mubr.bf16.mxu0 %v771
        %857 = vmatmul.mubr.bf16.gmra.mxu0 %v770
        %v858 = vpop.f32.mrf.mxu0
        %v859 = vadd.f32 0.0, %v858
        %v860 = vpop.f32.mrf.mxu0
        %v861 = vpop.f32.mrf.mxu0
        %v862 = vadd.f32 0.0, %v861
        %v863 = vpop.f32.mrf.mxu0
        %864 = vmatprep.mubr.bf16.mxu0 %v773
        %865 = vmatmul.mubr.bf16.gmra.mxu0 %v772
        %v866 = vpop.f32.mrf.mxu0
        %v867 = vadd.f32 0.0, %v866
        %v868 = vpop.f32.mrf.mxu0
        %v869 = vpop.f32.mrf.mxu0
        %v870 = vadd.f32 0.0, %v869
        %v871 = vpop.f32.mrf.mxu0
        %872 = vmatprep.mubr.bf16.mxu0 %v775
        %873 = vmatmul.mubr.bf16.gmra.mxu0 %v774
        %v874 = vpop.f32.mrf.mxu0
        %v875 = vadd.f32 0.0, %v874
        %v876 = vpop.f32.mrf.mxu0
        %v877 = vpop.f32.mrf.mxu0
        %v878 = vadd.f32 0.0, %v877
        %v879 = vpop.f32.mrf.mxu0
        %880 = vdwg.mxu0
        %vm881 = vcmask 523264
        %v882 = vsel %vm881, %v851, -inf
        %883 = vmax.xlane.f32.xlu0 %v882
        %v884 = vpop.xlane.xlu0 %883
        %v885 = vsel %vm881, %v854, -inf
        %886 = vmax.xlane.f32.xlu0 %v885
        %v887 = vpop.xlane.xlu0 %886
        %v888 = vsel %vm881, %v859, -inf
        %889 = vmax.xlane.f32.xlu0 %v888
        %v890 = vpop.xlane.xlu0 %889
        %v891 = vsel %vm881, %v862, -inf
        %892 = vmax.xlane.f32.xlu0 %v891
        %v893 = vpop.xlane.xlu0 %892
        %v894 = vsel %vm881, %v867, -inf
        %895 = vmax.xlane.f32.xlu0 %v894
        %v896 = vpop.xlane.xlu0 %895
        %v897 = vsel %vm881, %v870, -inf
        %898 = vmax.xlane.f32.xlu0 %v897
        %v899 = vpop.xlane.xlu0 %898
        %v900 = vsel %vm881, %v875, -inf
        %901 = vmax.xlane.f32.xlu0 %v900
        %v902 = vpop.xlane.xlu0 %901
        %v903 = vsel %vm881, %v878, -inf
        %904 = vmax.xlane.f32.xlu0 %v903
        %v905 = vpop.xlane.xlu0 %904
        %v906 = vsub.f32 %v851, %v884
        %v907 = vsub.f32 %v854, %v887
        %v908 = vsub.f32 %v859, %v890
        %v909 = vsub.f32 %v862, %v893
        %v910 = vsub.f32 %v867, %v896
        %v911 = vsub.f32 %v870, %v899
        %v912 = vsub.f32 %v875, %v902
        %v913 = vsub.f32 %v878, %v905
        %v914 = vmul.f32 %v906, 1.442695
        %v915 = vpow.pop %v914
        %v916 = vmul.f32 %v907, 1.442695
        %v917 = vpow.pop %v916
        %v918 = vmul.f32 %v908, 1.442695
        %v919 = vpow.pop %v918
        %v920 = vmul.f32 %v909, 1.442695
        %v921 = vpow.pop %v920
        %v922 = vmul.f32 %v910, 1.442695
        %v923 = vpow.pop %v922
        %v924 = vmul.f32 %v911, 1.442695
        %v925 = vpow.pop %v924
        %v926 = vmul.f32 %v912, 1.442695
        %v927 = vpow.pop %v926
        %v928 = vmul.f32 %v913, 1.442695
        %v929 = vpow.pop %v928
        %v930 = vsel %vm881, %v915, 0.0
        %931 = vadd.xlane.f32.xlu0 %v930
        %v932 = vpop.xlane.xlu0 %931
        %v933 = vsel %vm881, %v917, 0.0
        %934 = vadd.xlane.f32.xlu0 %v933
        %v935 = vpop.xlane.xlu0 %934
        %v936 = vsel %vm881, %v919, 0.0
        %937 = vadd.xlane.f32.xlu0 %v936
        %v938 = vpop.xlane.xlu0 %937
        %v939 = vsel %vm881, %v921, 0.0
        %940 = vadd.xlane.f32.xlu0 %v939
        %v941 = vpop.xlane.xlu0 %940
        %v942 = vsel %vm881, %v923, 0.0
        %943 = vadd.xlane.f32.xlu0 %v942
        %v944 = vpop.xlane.xlu0 %943
        %v945 = vsel %vm881, %v925, 0.0
        %946 = vadd.xlane.f32.xlu0 %v945
        %v947 = vpop.xlane.xlu0 %946
        %v948 = vsel %vm881, %v927, 0.0
        %949 = vadd.xlane.f32.xlu0 %v948
        %v950 = vpop.xlane.xlu0 %949
        %v951 = vsel %vm881, %v929, 0.0
        %952 = vadd.xlane.f32.xlu0 %v951
        %v953 = vpop.xlane.xlu0 %952
        %v954 = vrcp.pop %v932
        %v955 = vrcp.pop %v935
        %v956 = vrcp.pop %v938
        %v957 = vrcp.pop %v941
        %v958 = vrcp.pop %v944
        %v959 = vrcp.pop %v947
        %v960 = vrcp.pop %v950
        %v961 = vrcp.pop %v953
        %v962 = vpack.c.bf16 %v917, %v915
        %v963 = vpack.c.bf16 %v921, %v919
        %v964 = vpack.c.bf16 %v925, %v923
        %v965 = vpack.c.bf16 %v929, %v927
        %v974 = vunpack.c.l.b16 %v689
        %v975 = vunpack.c.l.b16 %v691
        %v976 = vunpack.c.l.b16 %v693
        %v977 = vunpack.c.l.b16 %v695
        %v978 = vunpack.c.l.b16 %v697
        %v979 = vunpack.c.l.b16 %v699
        %v980 = vunpack.c.l.b16 %v701
        %v981 = vunpack.c.l.b16 %v703
        %v982 = vpack.c.b16 %v975, %v974
        %v983 = vpack.c.b16 %v977, %v976
        %v984 = vpack.c.b16 %v979, %v978
        %v985 = vpack.c.b16 %v981, %v980
        %v991 = vsel %vm881, %v962, 0
        %v994 = vsel %vm881, %v963, 0
        %v997 = vsel %vm881, %v964, 0
        %v1000 = vsel %vm881, %v965, 0
        %1002 = vmatprep.subr.bf16.mxu0 0
        %1003 = vmatpush1.bf16.msra.mxu0 0
        %1004 = vmatprep.subr.bf16.mxu0 0
        %1005 = vmatpush1.bf16.msra.mxu0 0
        %1006 = vmatprep.subr.bf16.mxu0 0
        %1007 = vmatpush1.bf16.msra.mxu0 0
        %1008 = vmatprep.subr.bf16.mxu0 0
        %1009 = vmatpush1.bf16.msra.mxu0 0
        %1010 = vmatprep.subr.bf16.mxu0 0
        %1011 = vmatpush1.bf16.msra.mxu0 %v985
        %1012 = vmatprep.subr.bf16.mxu0 0
        %1013 = vmatpush1.bf16.msra.mxu0 %v984
        %1014 = vmatprep.subr.bf16.mxu0 0
        %1015 = vmatpush1.bf16.msra.mxu0 %v983
        %1016 = vmatprep.subr.bf16.mxu0 0
        %1017 = vmatpush1.bf16.msra.mxu0 %v982
        %1018 = vmatprep.subr.bf16.mxu0 0
        %1019 = vmatpush2.bf16.msra.mxu0 0
        %1020 = vmatprep.subr.bf16.mxu0 0
        %1021 = vmatpush2.bf16.msra.mxu0 0
        %1022 = vmatprep.subr.bf16.mxu0 0
        %1023 = vmatpush2.bf16.msra.mxu0 0
        %1024 = vmatprep.subr.bf16.mxu0 0
        %1025 = vmatpush2.bf16.msra.mxu0 0
        %1026 = vmatprep.subr.bf16.mxu0 0
        %1027 = vmatpush2.bf16.msra.mxu0 0
        %1028 = vmatprep.subr.bf16.mxu0 0
        %1029 = vmatpush2.bf16.msra.mxu0 0
        %1030 = vmatprep.subr.bf16.mxu0 0
        %1031 = vmatpush2.bf16.msra.mxu0 0
        %1032 = vmatprep.subr.bf16.mxu0 0
        %1033 = vmatpush2.bf16.msra.mxu0 0
        %1034 = vmatprep.mubr.bf16.mxu0 0
        %1035 = vmatmul.mubr.bf16.gmra.mxu0 %v991
        %v1036 = vpop.f32.mrf.mxu0
        %v1037 = vadd.f32 0.0, %v1036
        %v1038 = vpop.f32.mrf.mxu0
        %v1039 = vpop.f32.mrf.mxu0
        %v1040 = vadd.f32 0.0, %v1039
        %v1041 = vpop.f32.mrf.mxu0
        %1042 = vmatprep.mubr.bf16.mxu0 0
        %1043 = vmatmul.mubr.bf16.gmra.mxu0 %v994
        %v1044 = vpop.f32.mrf.mxu0
        %v1045 = vadd.f32 0.0, %v1044
        %v1046 = vpop.f32.mrf.mxu0
        %v1047 = vpop.f32.mrf.mxu0
        %v1048 = vadd.f32 0.0, %v1047
        %v1049 = vpop.f32.mrf.mxu0
        %1050 = vmatprep.mubr.bf16.mxu0 0
        %1051 = vmatmul.mubr.bf16.gmra.mxu0 %v997
        %v1052 = vpop.f32.mrf.mxu0
        %v1053 = vadd.f32 0.0, %v1052
        %v1054 = vpop.f32.mrf.mxu0
        %v1055 = vpop.f32.mrf.mxu0
        %v1056 = vadd.f32 0.0, %v1055
        %v1057 = vpop.f32.mrf.mxu0
        %1058 = vmatprep.mubr.bf16.mxu0 0
        %1059 = vmatmul.mubr.bf16.gmra.mxu0 %v1000
        %v1060 = vpop.f32.mrf.mxu0
        %v1061 = vadd.f32 0.0, %v1060
        %v1062 = vpop.f32.mrf.mxu0
        %v1063 = vpop.f32.mrf.mxu0
        %v1064 = vadd.f32 0.0, %v1063
        %v1065 = vpop.f32.mrf.mxu0
        %1066 = vdwg.mxu0
        %v1067 = vmul.f32 %v1037, %v954
        %v1068 = vmul.f32 %v1040, %v955
        %v1069 = vmul.f32 %v1045, %v956
        %v1070 = vmul.f32 %v1048, %v957
        %v1071 = vmul.f32 %v1053, %v958
        %v1072 = vmul.f32 %v1056, %v959
        %v1073 = vmul.f32 %v1061, %v960
        %v1074 = vmul.f32 %v1064, %v961
        %1075 = vst [vmem:[%s244] sm:$0xff] %v1067
        %1076 = vst [vmem:[%s244 + $0x8] sm:$0xff] %v1068
        %1077 = vst [vmem:[%s244 + $0x10] sm:$0xff] %v1069
        %1078 = vst [vmem:[%s244 + $0x18] sm:$0xff] %v1070
        %1079 = vst [vmem:[%s244 + $0x20] sm:$0xff] %v1071
        %1080 = vst [vmem:[%s244 + $0x28] sm:$0xff] %v1072
        %1081 = vst [vmem:[%s244 + $0x30] sm:$0xff] %v1073
        %1082 = vst [vmem:[%s244 + $0x38] sm:$0xff] %v1074
        %s1083 = sand.u32 %s119, 1
        %s1084 = scalar_lea.sflag [#allocation6], %s1083
        %s1085 = sand.u32 %s119, 1
        %s1086 = smul.addr %s1085, 64
        %s1087 = scalar_lea.vmem [#allocation10], %s1086
        // Predicated region
        $region49: #{tpu_custom_call.1} parent=35 // pred_check
          %p1088 = pneg %p129
        $region50: #{tpu_custom_call.1} parent=35 // pred_check_branch
          %1090 = sbr.rel (%p1088) target = $region52
        $region51: #{tpu_custom_call.1} parent=35 // pred_region
          %s1092 = ssub.s32 1024, 1024
          %1093 = vsyncadd %s1084, %s1092
          %s1094 = smul.addr %s22, 8
          %s1095 = smul.addr %s1094, 128
          %s1096 = scalar_lea.hbm %s4, %s1095
          %s1097 = sshll.u32 %s1087, 4
          %s1098 = int_to_ptr.vmem [resolvable:$true] %s1097
          %1103 = dma.vmem_to_hbm [thread:$0]  %s1098, 1024, %s1096, %s1084, 128, 128, 8
        $region52: #{tpu_custom_call.1} parent=35 // pred_fallthru
          _
      $region36: #{tpu_custom_call.1} parent=5 // pred_fallthru
        _
      %p1104 = scmp.le.s32.totalorder 2, %s17
      // Predicated region
      $region53: #{tpu_custom_call.1} parent=5 // pred_check
        %p1105 = pneg %p1104
      $region54: #{tpu_custom_call.1} parent=5 // pred_check_branch
        %1107 = sbr.rel (%p1105) target = $region56
      $region55: #{tpu_custom_call.1} parent=5 // pred_region
        %s1108 = ssub.s32 %s17, 2
        // Predicated region
        $region57: #{tpu_custom_call.1} parent=55 // pred_check
          %p1109 = pneg %p135
        $region58: #{tpu_custom_call.1} parent=55 // pred_check_branch
          %1111 = sbr.rel (%p1109) target = $region60
        $region59: #{tpu_custom_call.1} parent=55 // pred_region
          %s1112 = sand.u32 %s120, 1
          %s1113 = scalar_lea.sflag [#allocation6], %s1112
          %s1114 = sand.u32 %s120, 1
          %s1115 = smul.addr %s1114, 64
          %s1116 = scalar_lea.vmem [#allocation10], %s1115
          %1117 = dma.done %s1113, 1024
        $region60: #{tpu_custom_call.1} parent=55 // pred_fallthru
          _
      $region56: #{tpu_custom_call.1} parent=5 // pred_fallthru
        _
    $region6: #{tpu_custom_call.1} parent=1 // loop_footer
      %s21 = sadd.s32 1, %s17
    $region7: #{tpu_custom_call.1} parent=1 // loop_footer_branch
      %16 = sbr.rel target = $region3
    $region8: #{tpu_custom_call.1} parent=1 // loop_exit
      _
    %1118 = vsyncpa [#allocation5], 1
    %s1119 = scalar_lea.sflag [#allocation5], 1
    %1120 = vsyncpa %s1119, 1
    %1121 = vsyncpa [#allocation8], 1
    %1122 = vsyncpa [#allocation6], 1
    %s1123 = scalar_lea.sflag [#allocation6], 1
    %1124 = vsyncpa %s1123, 1

</llo_original>
